<compile_context>
chip_gen: v5e
topology: v5e:2x2
jax: 0.10.0
libtpu: 0.0.40
codegen_flags: <defaults>
</compile_context>

<pallas_src>
import jax
import jax.numpy as jnp
from jax import lax
from jax.experimental import pallas as pl
from jax.experimental.pallas import tpu as pltpu

N_STEPS = 64   # fixed RK4 steps over t in [0, 1]
TILE_B = 128   # batch tile on the lane axis
UNROLL = 2     # RK4 steps inlined per fori_loop iteration


def _make_ode_kernel(d, hidden, tile_b, n_steps, unroll):
    assert n_steps % unroll == 0

    def ode_kernel(q_ref, v_ref, w1q_ref, w1v_ref, w2_ref, w3_ref,
                   b1_ref, b2_ref, b3_ref, qo_ref, vo_ref):
        # Weights (already transposed on the host): rhs() is three plain W @ X.
        w1q = w1q_ref[...]          # (H, d)
        w1v = w1v_ref[...]          # (H, d)
        w2 = w2_ref[...]            # (H, H)
        w3 = w3_ref[...]            # (d, H)

        # Hoist bias broadcasts out of the integration loop (JAX does not CSE
        # broadcast_in_dim; leaving them inside rhs() re-emits them 256x).
        b1 = jnp.broadcast_to(b1_ref[...], (hidden, tile_b))
        b2 = jnp.broadcast_to(b2_ref[...], (hidden, tile_b))
        b3 = jnp.broadcast_to(b3_ref[...], (d, tile_b))

        def rhs(q, v):
            # dq/dt = v ; dv/dt = MLP([q|v]); batch on the 128-wide lane axis.
            h = jnp.tanh(jnp.dot(w1q, q, preferred_element_type=jnp.float32)
                         + jnp.dot(w1v, v, preferred_element_type=jnp.float32)
                         + b1)
            h = jnp.tanh(jnp.dot(w2, h, preferred_element_type=jnp.float32) + b2)
            a = jnp.dot(w3, h, preferred_element_type=jnp.float32) + b3
            return v, a

        dt = jnp.float32(1.0 / n_steps)
        half = jnp.float32(0.5) * dt
        sixth = dt / jnp.float32(6.0)

        def rk4(carry):
            q, v = carry
            k1q, k1v = rhs(q, v)
            k2q, k2v = rhs(q + half * k1q, v + half * k1v)
            k3q, k3v = rhs(q + half * k2q, v + half * k2v)
            k4q, k4v = rhs(q + dt * k3q, v + dt * k3v)
            q = q + sixth * (k1q + 2.0 * k2q + 2.0 * k3q + k4q)
            v = v + sixth * (k1v + 2.0 * k2v + 2.0 * k3v + k4v)
            return q, v

        def step(_, carry):
            for _ in range(unroll):          # trace-time unroll
                carry = rk4(carry)
            return carry

        q1, v1 = lax.fori_loop(0, n_steps // unroll, step,
                               (q_ref[...], v_ref[...]))
        qo_ref[...] = q1
        vo_ref[...] = v1

    return ode_kernel


def second_order_odenet_forward(x, params, n_steps=N_STEPS, tile_b=TILE_B):
    """x: (B, input_dim) float32. params: dict of W1,b1,W2,b2,W3,b3 (in,out)/(1,out)."""
    B, D = x.shape
    d = D // 2
    w1, b1 = params["W1"], params["b1"]   # (D, H), (1, H)
    w2, b2 = params["W2"], params["b2"]   # (H, H), (1, H)
    w3, b3 = params["W3"], params["b3"]   # (H, d), (1, d)
    H = w1.shape[1]

    # Transposed layout: batch on the lane axis, features on sublanes.
    x_t = jnp.asarray(x, jnp.float32).T            # (D, B)
    q_t = x_t[:d]                                  # (d, B)
    v_t = x_t[d:]                                  # (d, B)
    b_pad = pl.cdiv(B, tile_b) * tile_b
    if b_pad != B:
        pad = ((0, 0), (0, b_pad - B))
        q_t = jnp.pad(q_t, pad)
        v_t = jnp.pad(v_t, pad)

    # Pre-transpose / split weights once (outside the kernel).
    w1q_t = w1[:d].T                               # (H, d)
    w1v_t = w1[d:].T                               # (H, d)
    w2_t = w2.T                                    # (H, H)
    w3_t = w3.T                                    # (d, H)
    b1_t = b1.reshape(1, H).T                      # (H, 1)
    b2_t = b2.reshape(1, H).T                      # (H, 1)
    b3_t = b3.reshape(1, d).T                      # (d, 1)

    kernel = _make_ode_kernel(d, H, tile_b, n_steps, UNROLL)

    def full0(arr):
        return pl.BlockSpec(arr.shape, lambda i: (0,) * arr.ndim)

    state_spec = pl.BlockSpec((d, tile_b), lambda i: (0, i))

    # Advisory cost hint: the serial 64-step RK4 chain is far more expensive
    # than the tiny I/O footprint suggests.
    flops_per_rhs = 2 * b_pad * (D * H + H * H + H * d)
    cost = pl.CostEstimate(
        flops=4 * n_steps * flops_per_rhs,
        transcendentals=4 * n_steps * 2 * b_pad * H,
        bytes_accessed=4 * (4 * d * b_pad + D * H + H * H + H * d + 2 * H + d),
    )

    qo, vo = pl.pallas_call(
        kernel,
        out_shape=(jax.ShapeDtypeStruct((d, b_pad), jnp.float32),
                   jax.ShapeDtypeStruct((d, b_pad), jnp.float32)),
        grid_spec=pltpu.PrefetchScalarGridSpec(
            num_scalar_prefetch=0,
            grid=(b_pad // tile_b,),
            in_specs=[
                state_spec, state_spec,
                full0(w1q_t), full0(w1v_t), full0(w2_t), full0(w3_t),
                full0(b1_t), full0(b2_t), full0(b3_t),
            ],
            out_specs=(state_spec, state_spec),
        ),
        compiler_params=pltpu.CompilerParams(
            dimension_semantics=("parallel",),
        ),
        cost_estimate=cost,
    )(q_t, v_t, w1q_t, w1v_t, w2_t, w3_t, b1_t, b2_t, b3_t)

    # Back to the PyTorch layout: (B, D) = [q | v].
    return jnp.concatenate([qo[:, :B].T, vo[:, :B].T], axis=-1)


def init_params(key, input_dim, hidden_dim):
    """Deterministic init mimicking PyTorch nn.Linear default (uniform +/- 1/sqrt(fan_in)).
    Weights stored as (in, out)."""
    d = input_dim // 2
    ks = jax.random.split(key, 6)

    def lin(kw, kb, fan_in, fan_out):
        bound = 1.0 / jnp.sqrt(jnp.float32(fan_in))
        w = jax.random.uniform(kw, (fan_in, fan_out), jnp.float32, -bound, bound)
        b = jax.random.uniform(kb, (1, fan_out), jnp.float32, -bound, bound)
        return w, b

    W1, b1 = lin(ks[0], ks[1], input_dim, hidden_dim)
    W2, b2 = lin(ks[2], ks[3], hidden_dim, hidden_dim)
    W3, b3 = lin(ks[4], ks[5], hidden_dim, d)
    return {"W1": W1, "b1": b1, "W2": W2, "b2": b2, "W3": W3, "b3": b3}


def _reference_forward(x, params, n_steps=N_STEPS):
    """Pure-JAX reference (same fixed-step RK4, natural (B, D) layout)."""
    D = x.shape[1]
    d = D // 2

    def rhs(x):
        v = x[:, d:]
        h = jnp.tanh(x @ params["W1"] + params["b1"])
        h = jnp.tanh(h @ params["W2"] + params["b2"])
        a = h @ params["W3"] + params["b3"]
        return jnp.concatenate([v, a], axis=-1)

    dt = 1.0 / n_steps
    for _ in range(n_steps):
        k1 = rhs(x)
        k2 = rhs(x + 0.5 * dt * k1)
        k3 = rhs(x + 0.5 * dt * k2)
        k4 = rhs(x + dt * k3)
        x = x + (dt / 6.0) * (k1 + 2.0 * k2 + 2.0 * k3 + k4)
    return x


if __name__ == "__main__":
    batch = 8
    input_dim = 16   # must be even: [q | v]
    hidden_dim = 32

    key = jax.random.PRNGKey(0)
    kx, kp = jax.random.split(key)
    x = jax.random.normal(kx, (batch, input_dim), jnp.float32)
    params = init_params(kp, input_dim, hidden_dim)

    out = second_order_odenet_forward(x, params)
    out = jax.block_until_ready(out)

    ref = _reference_forward(x, params)
    assert out.shape == (batch, input_dim)
    assert jnp.allclose(out, ref, rtol=5e-5, atol=5e-5), "mismatch vs JAX reference"

    print("KERNEL_OK")
</pallas_src>

<mosaic_0001>
module attributes {stable_mosaic.version = 11 : i64} {
  func.func @ode_kernel(%arg0: i32, %arg1: memref<8x128xf32, #tpu.memory_space<vmem>>, %arg2: memref<8x128xf32, #tpu.memory_space<vmem>>, %arg3: memref<32x8xf32, #tpu.memory_space<vmem>>, %arg4: memref<32x8xf32, #tpu.memory_space<vmem>>, %arg5: memref<32x32xf32, #tpu.memory_space<vmem>>, %arg6: memref<8x32xf32, #tpu.memory_space<vmem>>, %arg7: memref<32x1xf32, #tpu.memory_space<vmem>>, %arg8: memref<32x1xf32, #tpu.memory_space<vmem>>, %arg9: memref<8x1xf32, #tpu.memory_space<vmem>>, %arg10: memref<8x128xf32, #tpu.memory_space<vmem>>, %arg11: memref<8x128xf32, #tpu.memory_space<vmem>>) attributes {dimension_semantics = [#tpu.dimension_semantics<parallel>], iteration_bounds = array<i64: 1>, scalar_prefetch = 0 : i64, scratch_operands = 0 : i64, tpu.core_type = #tpu.core_type<tc>, window_params = [{transform_indices = @transform_0, window_bounds = array<i64: 8, 128>}, {transform_indices = @transform_1, window_bounds = array<i64: 8, 128>}, {pipeline_mode = #tpu.pipeline_mode<synchronous>, transform_indices = @transform_2, window_bounds = array<i64: 32, 8>}, {pipeline_mode = #tpu.pipeline_mode<synchronous>, transform_indices = @transform_3, window_bounds = array<i64: 32, 8>}, {pipeline_mode = #tpu.pipeline_mode<synchronous>, transform_indices = @transform_4, window_bounds = array<i64: 32, 32>}, {pipeline_mode = #tpu.pipeline_mode<synchronous>, transform_indices = @transform_5, window_bounds = array<i64: 8, 32>}, {pipeline_mode = #tpu.pipeline_mode<synchronous>, transform_indices = @transform_6, window_bounds = array<i64: 32, 1>}, {pipeline_mode = #tpu.pipeline_mode<synchronous>, transform_indices = @transform_7, window_bounds = array<i64: 32, 1>}, {pipeline_mode = #tpu.pipeline_mode<synchronous>, transform_indices = @transform_8, window_bounds = array<i64: 8, 1>}, {transform_indices = @transform_9, window_bounds = array<i64: 8, 128>}, {transform_indices = @transform_10, window_bounds = array<i64: 8, 128>}]} {
    %c0 = arith.constant 0 : index
    %c0_0 = arith.constant 0 : index
    %0 = vector.load %arg3[%c0, %c0_0] : memref<32x8xf32, #tpu.memory_space<vmem>>, vector<32x8xf32>
    %c0_1 = arith.constant 0 : index
    %c0_2 = arith.constant 0 : index
    %1 = vector.load %arg4[%c0_1, %c0_2] : memref<32x8xf32, #tpu.memory_space<vmem>>, vector<32x8xf32>
    %c0_3 = arith.constant 0 : index
    %c0_4 = arith.constant 0 : index
    %2 = vector.load %arg5[%c0_3, %c0_4] : memref<32x32xf32, #tpu.memory_space<vmem>>, vector<32x32xf32>
    %c0_5 = arith.constant 0 : index
    %c0_6 = arith.constant 0 : index
    %3 = vector.load %arg6[%c0_5, %c0_6] : memref<8x32xf32, #tpu.memory_space<vmem>>, vector<8x32xf32>
    %c0_7 = arith.constant 0 : index
    %c0_8 = arith.constant 0 : index
    %4 = vector.load %arg7[%c0_7, %c0_8] : memref<32x1xf32, #tpu.memory_space<vmem>>, vector<32x1xf32>
    %5 = vector.shape_cast %4 : vector<32x1xf32> to vector<32x1xf32>
    %6 = vector.broadcast %5 : vector<32x1xf32> to vector<32x128xf32>
    %c0_9 = arith.constant 0 : index
    %c0_10 = arith.constant 0 : index
    %7 = vector.load %arg8[%c0_9, %c0_10] : memref<32x1xf32, #tpu.memory_space<vmem>>, vector<32x1xf32>
    %8 = vector.shape_cast %7 : vector<32x1xf32> to vector<32x1xf32>
    %9 = vector.broadcast %8 : vector<32x1xf32> to vector<32x128xf32>
    %c0_11 = arith.constant 0 : index
    %c0_12 = arith.constant 0 : index
    %10 = vector.load %arg9[%c0_11, %c0_12] : memref<8x1xf32, #tpu.memory_space<vmem>>, vector<8x1xf32>
    %11 = vector.shape_cast %10 : vector<8x1xf32> to vector<8x1xf32>
    %12 = vector.broadcast %11 : vector<8x1xf32> to vector<8x128xf32>
    %cst = arith.constant 5.000000e-01 : f32
    %cst_13 = arith.constant 1.562500e-02 : f32
    %13 = arith.mulf %cst, %cst_13 : f32
    %cst_14 = arith.constant 1.562500e-02 : f32
    %cst_15 = arith.constant 6.000000e+00 : f32
    %14 = arith.divf %cst_14, %cst_15 : f32
    %c0_16 = arith.constant 0 : index
    %c0_17 = arith.constant 0 : index
    %15 = vector.load %arg1[%c0_16, %c0_17] : memref<8x128xf32, #tpu.memory_space<vmem>>, vector<8x128xf32>
    %c0_18 = arith.constant 0 : index
    %c0_19 = arith.constant 0 : index
    %16 = vector.load %arg2[%c0_18, %c0_19] : memref<8x128xf32, #tpu.memory_space<vmem>>, vector<8x128xf32>
    %cst_20 = arith.constant 1.562500e-02 : f32
    %c0_i32 = arith.constant 0 : i32
    %c32_i32 = arith.constant 32 : i32
    %17 = arith.addi %c0_i32, %c32_i32 : i32
    %c1_i32 = arith.constant 1 : i32
    %18:2 = scf.for %arg12 = %c0_i32 to %17 step %c1_i32 iter_args(%arg13 = %15, %arg14 = %16) -> (vector<8x128xf32>, vector<8x128xf32>)  : i32 {
      %cst_25 = arith.constant dense<0.000000e+00> : vector<32x128xf32>
      %21 = tpu.matmul %0, %arg13, %cst_25 {dimension_numbers = #tpu.dot_dimension_numbers<[1], [0], [0], [1], [0, 0, 1, 1], [], []>} : vector<32x8xf32>, vector<8x128xf32>, vector<32x128xf32> -> vector<32x128xf32>
      %cst_26 = arith.constant dense<0.000000e+00> : vector<32x128xf32>
      %22 = tpu.matmul %1, %arg14, %cst_26 {dimension_numbers = #tpu.dot_dimension_numbers<[1], [0], [0], [1], [0, 0, 1, 1], [], []>} : vector<32x8xf32>, vector<8x128xf32>, vector<32x128xf32> -> vector<32x128xf32>
      %23 = arith.addf %21, %22 : vector<32x128xf32>
      %24 = arith.addf %23, %6 : vector<32x128xf32>
      %25 = math.tanh %24 : vector<32x128xf32>
      %cst_27 = arith.constant dense<0.000000e+00> : vector<32x128xf32>
      %26 = tpu.matmul %2, %25, %cst_27 {dimension_numbers = #tpu.dot_dimension_numbers<[1], [0], [0], [1], [0, 0, 1, 1], [], []>} : vector<32x32xf32>, vector<32x128xf32>, vector<32x128xf32> -> vector<32x128xf32>
      %27 = arith.addf %26, %9 : vector<32x128xf32>
      %28 = math.tanh %27 : vector<32x128xf32>
      %cst_28 = arith.constant dense<0.000000e+00> : vector<8x128xf32>
      %29 = tpu.matmul %3, %28, %cst_28 {dimension_numbers = #tpu.dot_dimension_numbers<[1], [0], [0], [1], [0, 0, 1, 1], [], []>} : vector<8x32xf32>, vector<32x128xf32>, vector<8x128xf32> -> vector<8x128xf32>
      %30 = arith.addf %29, %12 : vector<8x128xf32>
      %31 = vector.broadcast %13 : f32 to vector<8x128xf32>
      %32 = arith.mulf %31, %arg14 : vector<8x128xf32>
      %33 = arith.addf %arg13, %32 : vector<8x128xf32>
      %34 = vector.broadcast %13 : f32 to vector<8x128xf32>
      %35 = arith.mulf %34, %30 : vector<8x128xf32>
      %36 = arith.addf %arg14, %35 : vector<8x128xf32>
      %cst_29 = arith.constant dense<0.000000e+00> : vector<32x128xf32>
      %37 = tpu.matmul %0, %33, %cst_29 {dimension_numbers = #tpu.dot_dimension_numbers<[1], [0], [0], [1], [0, 0, 1, 1], [], []>} : vector<32x8xf32>, vector<8x128xf32>, vector<32x128xf32> -> vector<32x128xf32>
      %cst_30 = arith.constant dense<0.000000e+00> : vector<32x128xf32>
      %38 = tpu.matmul %1, %36, %cst_30 {dimension_numbers = #tpu.dot_dimension_numbers<[1], [0], [0], [1], [0, 0, 1, 1], [], []>} : vector<32x8xf32>, vector<8x128xf32>, vector<32x128xf32> -> vector<32x128xf32>
      %39 = arith.addf %37, %38 : vector<32x128xf32>
      %40 = arith.addf %39, %6 : vector<32x128xf32>
      %41 = math.tanh %40 : vector<32x128xf32>
      %cst_31 = arith.constant dense<0.000000e+00> : vector<32x128xf32>
      %42 = tpu.matmul %2, %41, %cst_31 {dimension_numbers = #tpu.dot_dimension_numbers<[1], [0], [0], [1], [0, 0, 1, 1], [], []>} : vector<32x32xf32>, vector<32x128xf32>, vector<32x128xf32> -> vector<32x128xf32>
      %43 = arith.addf %42, %9 : vector<32x128xf32>
      %44 = math.tanh %43 : vector<32x128xf32>
      %cst_32 = arith.constant dense<0.000000e+00> : vector<8x128xf32>
      %45 = tpu.matmul %3, %44, %cst_32 {dimension_numbers = #tpu.dot_dimension_numbers<[1], [0], [0], [1], [0, 0, 1, 1], [], []>} : vector<8x32xf32>, vector<32x128xf32>, vector<8x128xf32> -> vector<8x128xf32>
      %46 = arith.addf %45, %12 : vector<8x128xf32>
      %47 = vector.broadcast %13 : f32 to vector<8x128xf32>
      %48 = arith.mulf %47, %36 : vector<8x128xf32>
      %49 = arith.addf %arg13, %48 : vector<8x128xf32>
      %50 = vector.broadcast %13 : f32 to vector<8x128xf32>
      %51 = arith.mulf %50, %46 : vector<8x128xf32>
      %52 = arith.addf %arg14, %51 : vector<8x128xf32>
      %cst_33 = arith.constant dense<0.000000e+00> : vector<32x128xf32>
      %53 = tpu.matmul %0, %49, %cst_33 {dimension_numbers = #tpu.dot_dimension_numbers<[1], [0], [0], [1], [0, 0, 1, 1], [], []>} : vector<32x8xf32>, vector<8x128xf32>, vector<32x128xf32> -> vector<32x128xf32>
      %cst_34 = arith.constant dense<0.000000e+00> : vector<32x128xf32>
      %54 = tpu.matmul %1, %52, %cst_34 {dimension_numbers = #tpu.dot_dimension_numbers<[1], [0], [0], [1], [0, 0, 1, 1], [], []>} : vector<32x8xf32>, vector<8x128xf32>, vector<32x128xf32> -> vector<32x128xf32>
      %55 = arith.addf %53, %54 : vector<32x128xf32>
      %56 = arith.addf %55, %6 : vector<32x128xf32>
      %57 = math.tanh %56 : vector<32x128xf32>
      %cst_35 = arith.constant dense<0.000000e+00> : vector<32x128xf32>
      %58 = tpu.matmul %2, %57, %cst_35 {dimension_numbers = #tpu.dot_dimension_numbers<[1], [0], [0], [1], [0, 0, 1, 1], [], []>} : vector<32x32xf32>, vector<32x128xf32>, vector<32x128xf32> -> vector<32x128xf32>
      %59 = arith.addf %58, %9 : vector<32x128xf32>
      %60 = math.tanh %59 : vector<32x128xf32>
      %cst_36 = arith.constant dense<0.000000e+00> : vector<8x128xf32>
      %61 = tpu.matmul %3, %60, %cst_36 {dimension_numbers = #tpu.dot_dimension_numbers<[1], [0], [0], [1], [0, 0, 1, 1], [], []>} : vector<8x32xf32>, vector<32x128xf32>, vector<8x128xf32> -> vector<8x128xf32>
      %62 = arith.addf %61, %12 : vector<8x128xf32>
      %63 = vector.broadcast %cst_20 : f32 to vector<8x128xf32>
      %64 = arith.mulf %63, %52 : vector<8x128xf32>
      %65 = arith.addf %arg13, %64 : vector<8x128xf32>
      %66 = vector.broadcast %cst_20 : f32 to vector<8x128xf32>
      %67 = arith.mulf %66, %62 : vector<8x128xf32>
      %68 = arith.addf %arg14, %67 : vector<8x128xf32>
      %cst_37 = arith.constant dense<0.000000e+00> : vector<32x128xf32>
      %69 = tpu.matmul %0, %65, %cst_37 {dimension_numbers = #tpu.dot_dimension_numbers<[1], [0], [0], [1], [0, 0, 1, 1], [], []>} : vector<32x8xf32>, vector<8x128xf32>, vector<32x128xf32> -> vector<32x128xf32>
      %cst_38 = arith.constant dense<0.000000e+00> : vector<32x128xf32>
      %70 = tpu.matmul %1, %68, %cst_38 {dimension_numbers = #tpu.dot_dimension_numbers<[1], [0], [0], [1], [0, 0, 1, 1], [], []>} : vector<32x8xf32>, vector<8x128xf32>, vector<32x128xf32> -> vector<32x128xf32>
      %71 = arith.addf %69, %70 : vector<32x128xf32>
      %72 = arith.addf %71, %6 : vector<32x128xf32>
      %73 = math.tanh %72 : vector<32x128xf32>
      %cst_39 = arith.constant dense<0.000000e+00> : vector<32x128xf32>
      %74 = tpu.matmul %2, %73, %cst_39 {dimension_numbers = #tpu.dot_dimension_numbers<[1], [0], [0], [1], [0, 0, 1, 1], [], []>} : vector<32x32xf32>, vector<32x128xf32>, vector<32x128xf32> -> vector<32x128xf32>
      %75 = arith.addf %74, %9 : vector<32x128xf32>
      %76 = math.tanh %75 : vector<32x128xf32>
      %cst_40 = arith.constant dense<0.000000e+00> : vector<8x128xf32>
      %77 = tpu.matmul %3, %76, %cst_40 {dimension_numbers = #tpu.dot_dimension_numbers<[1], [0], [0], [1], [0, 0, 1, 1], [], []>} : vector<8x32xf32>, vector<32x128xf32>, vector<8x128xf32> -> vector<8x128xf32>
      %78 = arith.addf %77, %12 : vector<8x128xf32>
      %cst_41 = arith.constant 2.000000e+00 : f32
      %79 = vector.broadcast %cst_41 : f32 to vector<8x128xf32>
      %80 = arith.mulf %79, %36 : vector<8x128xf32>
      %81 = arith.addf %arg14, %80 : vector<8x128xf32>
      %cst_42 = arith.constant 2.000000e+00 : f32
      %82 = vector.broadcast %cst_42 : f32 to vector<8x128xf32>
      %83 = arith.mulf %82, %52 : vector<8x128xf32>
      %84 = arith.addf %81, %83 : vector<8x128xf32>
      %85 = arith.addf %84, %68 : vector<8x128xf32>
      %86 = vector.broadcast %14 : f32 to vector<8x128xf32>
      %87 = arith.mulf %86, %85 : vector<8x128xf32>
      %88 = arith.addf %arg13, %87 : vector<8x128xf32>
      %cst_43 = arith.constant 2.000000e+00 : f32
      %89 = vector.broadcast %cst_43 : f32 to vector<8x128xf32>
      %90 = arith.mulf %89, %46 : vector<8x128xf32>
      %91 = arith.addf %30, %90 : vector<8x128xf32>
      %cst_44 = arith.constant 2.000000e+00 : f32
      %92 = vector.broadcast %cst_44 : f32 to vector<8x128xf32>
      %93 = arith.mulf %92, %62 : vector<8x128xf32>
      %94 = arith.addf %91, %93 : vector<8x128xf32>
      %95 = arith.addf %94, %78 : vector<8x128xf32>
      %96 = vector.broadcast %14 : f32 to vector<8x128xf32>
      %97 = arith.mulf %96, %95 : vector<8x128xf32>
      %98 = arith.addf %arg14, %97 : vector<8x128xf32>
      %cst_45 = arith.constant dense<0.000000e+00> : vector<32x128xf32>
      %99 = tpu.matmul %0, %88, %cst_45 {dimension_numbers = #tpu.dot_dimension_numbers<[1], [0], [0], [1], [0, 0, 1, 1], [], []>} : vector<32x8xf32>, vector<8x128xf32>, vector<32x128xf32> -> vector<32x128xf32>
      %cst_46 = arith.constant dense<0.000000e+00> : vector<32x128xf32>
      %100 = tpu.matmul %1, %98, %cst_46 {dimension_numbers = #tpu.dot_dimension_numbers<[1], [0], [0], [1], [0, 0, 1, 1], [], []>} : vector<32x8xf32>, vector<8x128xf32>, vector<32x128xf32> -> vector<32x128xf32>
      %101 = arith.addf %99, %100 : vector<32x128xf32>
      %102 = arith.addf %101, %6 : vector<32x128xf32>
      %103 = math.tanh %102 : vector<32x128xf32>
      %cst_47 = arith.constant dense<0.000000e+00> : vector<32x128xf32>
      %104 = tpu.matmul %2, %103, %cst_47 {dimension_numbers = #tpu.dot_dimension_numbers<[1], [0], [0], [1], [0, 0, 1, 1], [], []>} : vector<32x32xf32>, vector<32x128xf32>, vector<32x128xf32> -> vector<32x128xf32>
      %105 = arith.addf %104, %9 : vector<32x128xf32>
      %106 = math.tanh %105 : vector<32x128xf32>
      %cst_48 = arith.constant dense<0.000000e+00> : vector<8x128xf32>
      %107 = tpu.matmul %3, %106, %cst_48 {dimension_numbers = #tpu.dot_dimension_numbers<[1], [0], [0], [1], [0, 0, 1, 1], [], []>} : vector<8x32xf32>, vector<32x128xf32>, vector<8x128xf32> -> vector<8x128xf32>
      %108 = arith.addf %107, %12 : vector<8x128xf32>
      %109 = vector.broadcast %13 : f32 to vector<8x128xf32>
      %110 = arith.mulf %109, %98 : vector<8x128xf32>
      %111 = arith.addf %88, %110 : vector<8x128xf32>
      %112 = vector.broadcast %13 : f32 to vector<8x128xf32>
      %113 = arith.mulf %112, %108 : vector<8x128xf32>
      %114 = arith.addf %98, %113 : vector<8x128xf32>
      %cst_49 = arith.constant dense<0.000000e+00> : vector<32x128xf32>
      %115 = tpu.matmul %0, %111, %cst_49 {dimension_numbers = #tpu.dot_dimension_numbers<[1], [0], [0], [1], [0, 0, 1, 1], [], []>} : vector<32x8xf32>, vector<8x128xf32>, vector<32x128xf32> -> vector<32x128xf32>
      %cst_50 = arith.constant dense<0.000000e+00> : vector<32x128xf32>
      %116 = tpu.matmul %1, %114, %cst_50 {dimension_numbers = #tpu.dot_dimension_numbers<[1], [0], [0], [1], [0, 0, 1, 1], [], []>} : vector<32x8xf32>, vector<8x128xf32>, vector<32x128xf32> -> vector<32x128xf32>
      %117 = arith.addf %115, %116 : vector<32x128xf32>
      %118 = arith.addf %117, %6 : vector<32x128xf32>
      %119 = math.tanh %118 : vector<32x128xf32>
      %cst_51 = arith.constant dense<0.000000e+00> : vector<32x128xf32>
      %120 = tpu.matmul %2, %119, %cst_51 {dimension_numbers = #tpu.dot_dimension_numbers<[1], [0], [0], [1], [0, 0, 1, 1], [], []>} : vector<32x32xf32>, vector<32x128xf32>, vector<32x128xf32> -> vector<32x128xf32>
      %121 = arith.addf %120, %9 : vector<32x128xf32>
      %122 = math.tanh %121 : vector<32x128xf32>
      %cst_52 = arith.constant dense<0.000000e+00> : vector<8x128xf32>
      %123 = tpu.matmul %3, %122, %cst_52 {dimension_numbers = #tpu.dot_dimension_numbers<[1], [0], [0], [1], [0, 0, 1, 1], [], []>} : vector<8x32xf32>, vector<32x128xf32>, vector<8x128xf32> -> vector<8x128xf32>
      %124 = arith.addf %123, %12 : vector<8x128xf32>
      %125 = vector.broadcast %13 : f32 to vector<8x128xf32>
      %126 = arith.mulf %125, %114 : vector<8x128xf32>
      %127 = arith.addf %88, %126 : vector<8x128xf32>
      %128 = vector.broadcast %13 : f32 to vector<8x128xf32>
      %129 = arith.mulf %128, %124 : vector<8x128xf32>
      %130 = arith.addf %98, %129 : vector<8x128xf32>
      %cst_53 = arith.constant dense<0.000000e+00> : vector<32x128xf32>
      %131 = tpu.matmul %0, %127, %cst_53 {dimension_numbers = #tpu.dot_dimension_numbers<[1], [0], [0], [1], [0, 0, 1, 1], [], []>} : vector<32x8xf32>, vector<8x128xf32>, vector<32x128xf32> -> vector<32x128xf32>
      %cst_54 = arith.constant dense<0.000000e+00> : vector<32x128xf32>
      %132 = tpu.matmul %1, %130, %cst_54 {dimension_numbers = #tpu.dot_dimension_numbers<[1], [0], [0], [1], [0, 0, 1, 1], [], []>} : vector<32x8xf32>, vector<8x128xf32>, vector<32x128xf32> -> vector<32x128xf32>
      %133 = arith.addf %131, %132 : vector<32x128xf32>
      %134 = arith.addf %133, %6 : vector<32x128xf32>
      %135 = math.tanh %134 : vector<32x128xf32>
      %cst_55 = arith.constant dense<0.000000e+00> : vector<32x128xf32>
      %136 = tpu.matmul %2, %135, %cst_55 {dimension_numbers = #tpu.dot_dimension_numbers<[1], [0], [0], [1], [0, 0, 1, 1], [], []>} : vector<32x32xf32>, vector<32x128xf32>, vector<32x128xf32> -> vector<32x128xf32>
      %137 = arith.addf %136, %9 : vector<32x128xf32>
      %138 = math.tanh %137 : vector<32x128xf32>
      %cst_56 = arith.constant dense<0.000000e+00> : vector<8x128xf32>
      %139 = tpu.matmul %3, %138, %cst_56 {dimension_numbers = #tpu.dot_dimension_numbers<[1], [0], [0], [1], [0, 0, 1, 1], [], []>} : vector<8x32xf32>, vector<32x128xf32>, vector<8x128xf32> -> vector<8x128xf32>
      %140 = arith.addf %139, %12 : vector<8x128xf32>
      %141 = vector.broadcast %cst_20 : f32 to vector<8x128xf32>
      %142 = arith.mulf %141, %130 : vector<8x128xf32>
      %143 = arith.addf %88, %142 : vector<8x128xf32>
      %144 = vector.broadcast %cst_20 : f32 to vector<8x128xf32>
      %145 = arith.mulf %144, %140 : vector<8x128xf32>
      %146 = arith.addf %98, %145 : vector<8x128xf32>
      %cst_57 = arith.constant dense<0.000000e+00> : vector<32x128xf32>
      %147 = tpu.matmul %0, %143, %cst_57 {dimension_numbers = #tpu.dot_dimension_numbers<[1], [0], [0], [1], [0, 0, 1, 1], [], []>} : vector<32x8xf32>, vector<8x128xf32>, vector<32x128xf32> -> vector<32x128xf32>
      %cst_58 = arith.constant dense<0.000000e+00> : vector<32x128xf32>
      %148 = tpu.matmul %1, %146, %cst_58 {dimension_numbers = #tpu.dot_dimension_numbers<[1], [0], [0], [1], [0, 0, 1, 1], [], []>} : vector<32x8xf32>, vector<8x128xf32>, vector<32x128xf32> -> vector<32x128xf32>
      %149 = arith.addf %147, %148 : vector<32x128xf32>
      %150 = arith.addf %149, %6 : vector<32x128xf32>
      %151 = math.tanh %150 : vector<32x128xf32>
      %cst_59 = arith.constant dense<0.000000e+00> : vector<32x128xf32>
      %152 = tpu.matmul %2, %151, %cst_59 {dimension_numbers = #tpu.dot_dimension_numbers<[1], [0], [0], [1], [0, 0, 1, 1], [], []>} : vector<32x32xf32>, vector<32x128xf32>, vector<32x128xf32> -> vector<32x128xf32>
      %153 = arith.addf %152, %9 : vector<32x128xf32>
      %154 = math.tanh %153 : vector<32x128xf32>
      %cst_60 = arith.constant dense<0.000000e+00> : vector<8x128xf32>
      %155 = tpu.matmul %3, %154, %cst_60 {dimension_numbers = #tpu.dot_dimension_numbers<[1], [0], [0], [1], [0, 0, 1, 1], [], []>} : vector<8x32xf32>, vector<32x128xf32>, vector<8x128xf32> -> vector<8x128xf32>
      %156 = arith.addf %155, %12 : vector<8x128xf32>
      %cst_61 = arith.constant 2.000000e+00 : f32
      %157 = vector.broadcast %cst_61 : f32 to vector<8x128xf32>
      %158 = arith.mulf %157, %114 : vector<8x128xf32>
      %159 = arith.addf %98, %158 : vector<8x128xf32>
      %cst_62 = arith.constant 2.000000e+00 : f32
      %160 = vector.broadcast %cst_62 : f32 to vector<8x128xf32>
      %161 = arith.mulf %160, %130 : vector<8x128xf32>
      %162 = arith.addf %159, %161 : vector<8x128xf32>
      %163 = arith.addf %162, %146 : vector<8x128xf32>
      %164 = vector.broadcast %14 : f32 to vector<8x128xf32>
      %165 = arith.mulf %164, %163 : vector<8x128xf32>
      %166 = arith.addf %88, %165 : vector<8x128xf32>
      %cst_63 = arith.constant 2.000000e+00 : f32
      %167 = vector.broadcast %cst_63 : f32 to vector<8x128xf32>
      %168 = arith.mulf %167, %124 : vector<8x128xf32>
      %169 = arith.addf %108, %168 : vector<8x128xf32>
      %cst_64 = arith.constant 2.000000e+00 : f32
      %170 = vector.broadcast %cst_64 : f32 to vector<8x128xf32>
      %171 = arith.mulf %170, %140 : vector<8x128xf32>
      %172 = arith.addf %169, %171 : vector<8x128xf32>
      %173 = arith.addf %172, %156 : vector<8x128xf32>
      %174 = vector.broadcast %14 : f32 to vector<8x128xf32>
      %175 = arith.mulf %174, %173 : vector<8x128xf32>
      %176 = arith.addf %98, %175 : vector<8x128xf32>
      scf.yield %166, %176 : vector<8x128xf32>, vector<8x128xf32>
    }
    %c0_21 = arith.constant 0 : index
    %c0_22 = arith.constant 0 : index
    %19 = vector.load %arg10[%c0_21, %c0_22] : memref<8x128xf32, #tpu.memory_space<vmem>>, vector<8x128xf32>
    tpu.vector_store %arg10[%c0_21, %c0_22], %18#0 {strides = array<i32>} : memref<8x128xf32, #tpu.memory_space<vmem>>, vector<8x128xf32>,
    %c0_23 = arith.constant 0 : index
    %c0_24 = arith.constant 0 : index
    %20 = vector.load %arg11[%c0_23, %c0_24] : memref<8x128xf32, #tpu.memory_space<vmem>>, vector<8x128xf32>
    tpu.vector_store %arg11[%c0_23, %c0_24], %18#1 {strides = array<i32>} : memref<8x128xf32, #tpu.memory_space<vmem>>, vector<8x128xf32>,
    return
  }
  func.func @transform_0(%arg0: i32) -> (i32, i32) {
    %c0_i32 = arith.constant 0 : i32
    %c0_i32_0 = arith.constant 0 : i32
    return %c0_i32, %arg0 : i32, i32
  }
  func.func @transform_1(%arg0: i32) -> (i32, i32) {
    %c0_i32 = arith.constant 0 : i32
    %c0_i32_0 = arith.constant 0 : i32
    return %c0_i32, %arg0 : i32, i32
  }
  func.func @transform_2(%arg0: i32) -> (i32, i32) {
    %c0_i32 = arith.constant 0 : i32
    %c0_i32_0 = arith.constant 0 : i32
    %c0_i32_1 = arith.constant 0 : i32
    return %c0_i32, %c0_i32_0 : i32, i32
  }
  func.func @transform_3(%arg0: i32) -> (i32, i32) {
    %c0_i32 = arith.constant 0 : i32
    %c0_i32_0 = arith.constant 0 : i32
    %c0_i32_1 = arith.constant 0 : i32
    return %c0_i32, %c0_i32_0 : i32, i32
  }
  func.func @transform_4(%arg0: i32) -> (i32, i32) {
    %c0_i32 = arith.constant 0 : i32
    %c0_i32_0 = arith.constant 0 : i32
    %c0_i32_1 = arith.constant 0 : i32
    return %c0_i32, %c0_i32_0 : i32, i32
  }
  func.func @transform_5(%arg0: i32) -> (i32, i32) {
    %c0_i32 = arith.constant 0 : i32
    %c0_i32_0 = arith.constant 0 : i32
    %c0_i32_1 = arith.constant 0 : i32
    return %c0_i32, %c0_i32_0 : i32, i32
  }
  func.func @transform_6(%arg0: i32) -> (i32, i32) {
    %c0_i32 = arith.constant 0 : i32
    %c0_i32_0 = arith.constant 0 : i32
    %c0_i32_1 = arith.constant 0 : i32
    return %c0_i32, %c0_i32_0 : i32, i32
  }
  func.func @transform_7(%arg0: i32) -> (i32, i32) {
    %c0_i32 = arith.constant 0 : i32
    %c0_i32_0 = arith.constant 0 : i32
    %c0_i32_1 = arith.constant 0 : i32
    return %c0_i32, %c0_i32_0 : i32, i32
  }
  func.func @transform_8(%arg0: i32) -> (i32, i32) {
    %c0_i32 = arith.constant 0 : i32
    %c0_i32_0 = arith.constant 0 : i32
    %c0_i32_1 = arith.constant 0 : i32
    return %c0_i32, %c0_i32_0 : i32, i32
  }
  func.func @transform_9(%arg0: i32) -> (i32, i32) {
    %c0_i32 = arith.constant 0 : i32
    %c0_i32_0 = arith.constant 0 : i32
    return %c0_i32, %arg0 : i32, i32
  }
  func.func @transform_10(%arg0: i32) -> (i32, i32) {
    %c0_i32 = arith.constant 0 : i32
    %c0_i32_0 = arith.constant 0 : i32
    return %c0_i32, %arg0 : i32, i32
  }
}

</mosaic_0001>

<llo_original>
// kernel: tpu_custom_call.1
$region0: #{tpu_custom_call.1}
  #allocation0 [shape = 'u32[]', space=smem, size = 0x4, offset = 0x4, fixed_abs, tag = 'smem constant byte address 0x4 - core index']
  #allocation1 [shape = 'u32[72,128]{1,0:T(1,128)}', space=vmem, size = 0x9000, scoped, tag = 'internal scratch']
  %s0 = inlined_call_operand.vmem [shape: f32[8,128], index: 0, kind: input, shape index: {}]
  %s1 = inlined_call_operand.vmem [shape: f32[8,128], index: 1, kind: input, shape index: {}]
  %s2 = inlined_call_operand.vmem [shape: f32[32,8], index: 2, kind: input, shape index: {}]
  %s3 = inlined_call_operand.vmem [shape: f32[32,8], index: 3, kind: input, shape index: {}]
  %s4 = inlined_call_operand.vmem [shape: f32[32,32], index: 4, kind: input, shape index: {}]
  %s5 = inlined_call_operand.vmem [shape: f32[8,32], index: 5, kind: input, shape index: {}]
  %s6 = inlined_call_operand.vmem [shape: f32[32,1], index: 6, kind: input, shape index: {}]
  %s7 = inlined_call_operand.vmem [shape: f32[32,1], index: 7, kind: input, shape index: {}]
  %s8 = inlined_call_operand.vmem [shape: f32[8,1], index: 8, kind: input, shape index: {}]
  %s9 = inlined_call_operand.hbm [shape: f32[8,128], index: 9, kind: output, shape index: {0}]
  %s10 = inlined_call_operand.hbm [shape: f32[8,128], index: 10, kind: output, shape index: {1}]
  %11 = xla_tuple %s9, %s10
  %s12 = sld [smem:[#allocation0]]
  $region61: #{tpu_custom_call.1} parent=0
    _
  %s14 = ssub.s32 1, %s12
  %s15 = scalar_select 0, %s14, %s12
  $region1: #{tpu_custom_call.1} parent=0
    #allocation2 [shape = 'u8[4096]{0}', space=vmem, size = 0x1000, scoped, tag = 'output window, operand 0, single buffered']
    #allocation3 [shape = 's32[1]{0}', space=sflag, size = 0x4, scoped, tag = 'scoped memory for tpu_custom_call.1']
    #allocation4 [shape = 'u8[4096]{0}', space=vmem, size = 0x1000, scoped, tag = 'output window, operand 1, single buffered']
    #allocation5 [shape = 's32[1]{0}', space=sflag, size = 0x4, scoped, tag = 'scoped memory for tpu_custom_call.1']
    %16 = vsyncpa [#allocation3], 0
    %17 = vsyncpa [#allocation5], 0
    // Predicated region
    $region2: #{tpu_custom_call.1} parent=1 // pred_check
      _
    $region3: #{tpu_custom_call.1} parent=1 // pred_check_branch
      %19 = sbr.rel (0) target = $region5
    $region4: #{tpu_custom_call.1} parent=1 // pred_region
      _
    $region5: #{tpu_custom_call.1} parent=1 // pred_fallthru
      _
    // Predicated region
    $region6: #{tpu_custom_call.1} parent=1 // pred_check
      _
    $region7: #{tpu_custom_call.1} parent=1 // pred_check_branch
      %21 = sbr.rel (0) target = $region9
    $region8: #{tpu_custom_call.1} parent=1 // pred_region
      _
    $region9: #{tpu_custom_call.1} parent=1 // pred_fallthru
      _
    // Predicated region
    $region10: #{tpu_custom_call.1} parent=1 // pred_check
      _
    $region11: #{tpu_custom_call.1} parent=1 // pred_check_branch
      %23 = sbr.rel (0) target = $region13
    $region12: #{tpu_custom_call.1} parent=1 // pred_region
      _
    $region13: #{tpu_custom_call.1} parent=1 // pred_fallthru
      _
    // Predicated region
    $region14: #{tpu_custom_call.1} parent=1 // pred_check
      _
    $region15: #{tpu_custom_call.1} parent=1 // pred_check_branch
      %25 = sbr.rel (0) target = $region17
    $region16: #{tpu_custom_call.1} parent=1 // pred_region
      _
    $region17: #{tpu_custom_call.1} parent=1 // pred_fallthru
      _
    // Predicated region
    $region18: #{tpu_custom_call.1} parent=1 // pred_check
      _
    $region19: #{tpu_custom_call.1} parent=1 // pred_check_branch
      %27 = sbr.rel (0) target = $region21
    $region20: #{tpu_custom_call.1} parent=1 // pred_region
      _
    $region21: #{tpu_custom_call.1} parent=1 // pred_fallthru
      _
    // Predicated region
    $region22: #{tpu_custom_call.1} parent=1 // pred_check
      _
    $region23: #{tpu_custom_call.1} parent=1 // pred_check_branch
      %29 = sbr.rel (0) target = $region25
    $region24: #{tpu_custom_call.1} parent=1 // pred_region
      _
    $region25: #{tpu_custom_call.1} parent=1 // pred_fallthru
      _
    // Predicated region
    $region26: #{tpu_custom_call.1} parent=1 // pred_check
      _
    $region27: #{tpu_custom_call.1} parent=1 // pred_check_branch
      %31 = sbr.rel (0) target = $region29
    $region28: #{tpu_custom_call.1} parent=1 // pred_region
      _
    $region29: #{tpu_custom_call.1} parent=1 // pred_fallthru
      _
    // Predicated region
    $region30: #{tpu_custom_call.1} parent=1 // pred_check
      _
    $region31: #{tpu_custom_call.1} parent=1 // pred_check_branch
      %33 = sbr.rel (0) target = $region33
    $region32: #{tpu_custom_call.1} parent=1 // pred_region
      _
    $region33: #{tpu_custom_call.1} parent=1 // pred_fallthru
      _
    // Predicated region
    $region34: #{tpu_custom_call.1} parent=1 // pred_check
      _
    $region35: #{tpu_custom_call.1} parent=1 // pred_check_branch
      %35 = sbr.rel (0) target = $region37
    $region36: #{tpu_custom_call.1} parent=1 // pred_region
      _
    $region37: #{tpu_custom_call.1} parent=1 // pred_fallthru
      _
    %v36 = vld [vmem:[%s2] sm:$0xff]
    %v37 = vld [vmem:[%s2 + $0x8] sm:$0xff]
    %v38 = vld [vmem:[%s2 + $0x10] sm:$0xff]
    %v39 = vld [vmem:[%s2 + $0x18] sm:$0xff]
    %v40 = vld [vmem:[%s3] sm:$0xff]
    %v41 = vld [vmem:[%s3 + $0x8] sm:$0xff]
    %v42 = vld [vmem:[%s3 + $0x10] sm:$0xff]
    %v43 = vld [vmem:[%s3 + $0x18] sm:$0xff]
    %v44 = vld [vmem:[%s4] sm:$0xff]
    %v45 = vld [vmem:[%s4 + $0x8] sm:$0xff]
    %v46 = vld [vmem:[%s4 + $0x10] sm:$0xff]
    %v47 = vld [vmem:[%s4 + $0x18] sm:$0xff]
    %v48 = vld [vmem:[%s5] sm:$0xff]
    %v49 = vld [vmem:[%s6] sm:$0xff]
    %v50 = vld [vmem:[%s6 + $0x8] sm:$0xff]
    %v51 = vld [vmem:[%s6 + $0x10] sm:$0xff]
    %v52 = vld [vmem:[%s6 + $0x18] sm:$0xff]
    %54 = vset.pattern.permute.xlu0 0
    %55 = vperm.xlu0 %54, %v49
    %v56 = vpop.permute.xlu0 %55
    %59 = vset.pattern.permute.xlu0 0
    %60 = vperm.xlu0 %59, %v50
    %v61 = vpop.permute.xlu0 %60
    %64 = vset.pattern.permute.xlu0 0
    %65 = vperm.xlu0 %64, %v51
    %v66 = vpop.permute.xlu0 %65
    %69 = vset.pattern.permute.xlu0 0
    %70 = vperm.xlu0 %69, %v52
    %v71 = vpop.permute.xlu0 %70
    %v73 = vld [vmem:[%s7] sm:$0xff]
    %v74 = vld [vmem:[%s7 + $0x8] sm:$0xff]
    %v75 = vld [vmem:[%s7 + $0x10] sm:$0xff]
    %v76 = vld [vmem:[%s7 + $0x18] sm:$0xff]
    %78 = vset.pattern.permute.xlu0 0
    %79 = vperm.xlu0 %78, %v73
    %v80 = vpop.permute.xlu0 %79
    %83 = vset.pattern.permute.xlu0 0
    %84 = vperm.xlu0 %83, %v74
    %v85 = vpop.permute.xlu0 %84
    %88 = vset.pattern.permute.xlu0 0
    %89 = vperm.xlu0 %88, %v75
    %v90 = vpop.permute.xlu0 %89
    %93 = vset.pattern.permute.xlu0 0
    %94 = vperm.xlu0 %93, %v76
    %v95 = vpop.permute.xlu0 %94
    %v97 = vld [vmem:[%s8] sm:$0xff]
    %99 = vset.pattern.permute.xlu0 0
    %100 = vperm.xlu0 %99, %v97
    %v101 = vpop.permute.xlu0 %100
    %v103 = vld [vmem:[%s0] sm:$0xff]
    %v104 = vld [vmem:[%s1] sm:$0xff]
    loop: start=0, step=1, limit=32
    $region38: #{tpu_custom_call.1} parent=1 // loop_pre_header
      _
    $region39: #{tpu_custom_call.1} parent=1 // loop_header
      %s106 = sphi 0, %s110
      %p107 = scmp.ge.s32.totalorder %s106, 32
      %v111 = vphi %v103, %v1150
      %v112 = vphi %v104, %v1157
    $region40: #{tpu_custom_call.1} parent=1 // loop_header_branch
      %109 = sbr.rel (%p107) target = $region44
    $region41: #{tpu_custom_call.1} parent=1 // loop_body
      %vm113 = vcmask 64512
      %v115 = vsel %vm113, %v40, 0
      %v118 = vsel %vm113, %v41, 0
      %v121 = vsel %vm113, %v42, 0
      %v124 = vsel %vm113, %v43, 0
      %126 = vmatpush.msra.mxu0 0.0
      %127 = vmatpush.msra.mxu0 0.0
      %128 = vmatpush.msra.mxu0 0.0
      %129 = vmatpush.msra.mxu0 0.0
      %130 = vmatpush.msra.mxu0 0.0
      %131 = vmatpush.msra.mxu0 0.0
      %132 = vmatpush.msra.mxu0 0.0
      %133 = vmatpush.msra.mxu0 0.0
      %134 = vmatpush.msra.mxu0 0.0
      %135 = vmatpush.msra.mxu0 0.0
      %136 = vmatpush.msra.mxu0 0.0
      %137 = vmatpush.msra.mxu0 0.0
      %138 = vmatpush.msra.mxu0 0.0
      %139 = vmatpush.msra.mxu0 0.0
      %140 = vmatpush.msra.mxu0 0.0
      %141 = vmatpush.msra.mxu0 %v112
      %142 = vmatmul.f32.gmra.mxu0 %v115
      %v143 = vpop.f32.mrf.mxu0
      %v144 = vadd.f32 0.0, %v143
      %145 = vmatmul.f32.gmra.mxu0 %v118
      %v146 = vpop.f32.mrf.mxu0
      %v147 = vadd.f32 0.0, %v146
      %148 = vmatmul.f32.gmra.mxu0 %v121
      %v149 = vpop.f32.mrf.mxu0
      %v150 = vadd.f32 0.0, %v149
      %151 = vmatmul.f32.gmra.mxu0 %v124
      %v152 = vpop.f32.mrf.mxu0
      %v153 = vadd.f32 0.0, %v152
      %154 = vdwg.mxu0
      %v156 = vsel %vm113, %v36, 0
      %v159 = vsel %vm113, %v37, 0
      %v162 = vsel %vm113, %v38, 0
      %v165 = vsel %vm113, %v39, 0
      %167 = vmatpush.msra.mxu0 0.0
      %168 = vmatpush.msra.mxu0 0.0
      %169 = vmatpush.msra.mxu0 0.0
      %170 = vmatpush.msra.mxu0 0.0
      %171 = vmatpush.msra.mxu0 0.0
      %172 = vmatpush.msra.mxu0 0.0
      %173 = vmatpush.msra.mxu0 0.0
      %174 = vmatpush.msra.mxu0 0.0
      %175 = vmatpush.msra.mxu0 0.0
      %176 = vmatpush.msra.mxu0 0.0
      %177 = vmatpush.msra.mxu0 0.0
      %178 = vmatpush.msra.mxu0 0.0
      %179 = vmatpush.msra.mxu0 0.0
      %180 = vmatpush.msra.mxu0 0.0
      %181 = vmatpush.msra.mxu0 0.0
      %182 = vmatpush.msra.mxu0 %v111
      %183 = vmatmul.f32.gmra.mxu0 %v156
      %v184 = vpop.f32.mrf.mxu0
      %v185 = vadd.f32 %v144, %v184
      %186 = vmatmul.f32.gmra.mxu0 %v159
      %v187 = vpop.f32.mrf.mxu0
      %v188 = vadd.f32 %v147, %v187
      %189 = vmatmul.f32.gmra.mxu0 %v162
      %v190 = vpop.f32.mrf.mxu0
      %v191 = vadd.f32 %v150, %v190
      %192 = vmatmul.f32.gmra.mxu0 %v165
      %v193 = vpop.f32.mrf.mxu0
      %v194 = vadd.f32 %v153, %v193
      %195 = vdwg.mxu0
      %v196 = vadd.f32 %v185, %v56
      %v197 = vadd.f32 %v188, %v61
      %v198 = vadd.f32 %v191, %v66
      %v199 = vadd.f32 %v194, %v71
      %v200 = vtanh.pop %v196
      %v201 = vtanh.pop %v197
      %v202 = vtanh.pop %v198
      %v203 = vtanh.pop %v199
      %vm204 = vcmask 261120
      %v206 = vsel %vm204, %v44, 0
      %v209 = vsel %vm204, %v45, 0
      %v212 = vsel %vm204, %v46, 0
      %v215 = vsel %vm204, %v47, 0
      %217 = vmatpush.msra.mxu0 0.0
      %218 = vmatpush.msra.mxu0 0.0
      %219 = vmatpush.msra.mxu0 0.0
      %220 = vmatpush.msra.mxu0 0.0
      %221 = vmatpush.msra.mxu0 0.0
      %222 = vmatpush.msra.mxu0 0.0
      %223 = vmatpush.msra.mxu0 0.0
      %224 = vmatpush.msra.mxu0 0.0
      %225 = vmatpush.msra.mxu0 0.0
      %226 = vmatpush.msra.mxu0 0.0
      %227 = vmatpush.msra.mxu0 0.0
      %228 = vmatpush.msra.mxu0 0.0
      %229 = vmatpush.msra.mxu0 %v203
      %230 = vmatpush.msra.mxu0 %v202
      %231 = vmatpush.msra.mxu0 %v201
      %232 = vmatpush.msra.mxu0 %v200
      %233 = vmatmul.f32.gmra.mxu0 %v206
      %v234 = vpop.f32.mrf.mxu0
      %v235 = vadd.f32 %v80, %v234
      %236 = vmatmul.f32.gmra.mxu0 %v209
      %v237 = vpop.f32.mrf.mxu0
      %v238 = vadd.f32 %v85, %v237
      %239 = vmatmul.f32.gmra.mxu0 %v212
      %v240 = vpop.f32.mrf.mxu0
      %v241 = vadd.f32 %v90, %v240
      %242 = vmatmul.f32.gmra.mxu0 %v215
      %v243 = vpop.f32.mrf.mxu0
      %v244 = vadd.f32 %v95, %v243
      %245 = vdwg.mxu0
      %v246 = vtanh.pop %v235
      %v247 = vtanh.pop %v238
      %v248 = vtanh.pop %v241
      %v249 = vtanh.pop %v244
      %v251 = vsel %vm204, %v48, 0
      %253 = vmatpush.msra.mxu0 0.0
      %254 = vmatpush.msra.mxu0 0.0
      %255 = vmatpush.msra.mxu0 0.0
      %256 = vmatpush.msra.mxu0 0.0
      %257 = vmatpush.msra.mxu0 0.0
      %258 = vmatpush.msra.mxu0 0.0
      %259 = vmatpush.msra.mxu0 0.0
      %260 = vmatpush.msra.mxu0 0.0
      %261 = vmatpush.msra.mxu0 0.0
      %262 = vmatpush.msra.mxu0 0.0
      %263 = vmatpush.msra.mxu0 0.0
      %264 = vmatpush.msra.mxu0 0.0
      %265 = vmatpush.msra.mxu0 %v249
      %266 = vmatpush.msra.mxu0 %v248
      %267 = vmatpush.msra.mxu0 %v247
      %268 = vmatpush.msra.mxu0 %v246
      %269 = vmatmul.f32.gmra.mxu0 %v251
      %v270 = vpop.f32.mrf.mxu0
      %v271 = vadd.f32 %v101, %v270
      %272 = vdwg.mxu0
      %v273 = vmul.f32 %v112, 0.0078125
      %v274 = vadd.f32 %v111, %v273
      %v275 = vmul.f32 %v271, 0.0078125
      %v276 = vadd.f32 %v112, %v275
      %277 = vmatpush.msra.mxu0 0.0
      %278 = vmatpush.msra.mxu0 0.0
      %279 = vmatpush.msra.mxu0 0.0
      %280 = vmatpush.msra.mxu0 0.0
      %281 = vmatpush.msra.mxu0 0.0
      %282 = vmatpush.msra.mxu0 0.0
      %283 = vmatpush.msra.mxu0 0.0
      %284 = vmatpush.msra.mxu0 0.0
      %285 = vmatpush.msra.mxu0 0.0
      %286 = vmatpush.msra.mxu0 0.0
      %287 = vmatpush.msra.mxu0 0.0
      %288 = vmatpush.msra.mxu0 0.0
      %289 = vmatpush.msra.mxu0 0.0
      %290 = vmatpush.msra.mxu0 0.0
      %291 = vmatpush.msra.mxu0 0.0
      %292 = vmatpush.msra.mxu0 %v276
      %293 = vmatmul.f32.gmra.mxu0 %v115
      %v294 = vpop.f32.mrf.mxu0
      %v295 = vadd.f32 0.0, %v294
      %296 = vmatmul.f32.gmra.mxu0 %v118
      %v297 = vpop.f32.mrf.mxu0
      %v298 = vadd.f32 0.0, %v297
      %299 = vmatmul.f32.gmra.mxu0 %v121
      %v300 = vpop.f32.mrf.mxu0
      %v301 = vadd.f32 0.0, %v300
      %302 = vmatmul.f32.gmra.mxu0 %v124
      %v303 = vpop.f32.mrf.mxu0
      %v304 = vadd.f32 0.0, %v303
      %305 = vdwg.mxu0
      %306 = vmatpush.msra.mxu0 0.0
      %307 = vmatpush.msra.mxu0 0.0
      %308 = vmatpush.msra.mxu0 0.0
      %309 = vmatpush.msra.mxu0 0.0
      %310 = vmatpush.msra.mxu0 0.0
      %311 = vmatpush.msra.mxu0 0.0
      %312 = vmatpush.msra.mxu0 0.0
      %313 = vmatpush.msra.mxu0 0.0
      %314 = vmatpush.msra.mxu0 0.0
      %315 = vmatpush.msra.mxu0 0.0
      %316 = vmatpush.msra.mxu0 0.0
      %317 = vmatpush.msra.mxu0 0.0
      %318 = vmatpush.msra.mxu0 0.0
      %319 = vmatpush.msra.mxu0 0.0
      %320 = vmatpush.msra.mxu0 0.0
      %321 = vmatpush.msra.mxu0 %v274
      %322 = vmatmul.f32.gmra.mxu0 %v156
      %v323 = vpop.f32.mrf.mxu0
      %v324 = vadd.f32 %v295, %v323
      %325 = vmatmul.f32.gmra.mxu0 %v159
      %v326 = vpop.f32.mrf.mxu0
      %v327 = vadd.f32 %v298, %v326
      %328 = vmatmul.f32.gmra.mxu0 %v162
      %v329 = vpop.f32.mrf.mxu0
      %v330 = vadd.f32 %v301, %v329
      %331 = vmatmul.f32.gmra.mxu0 %v165
      %v332 = vpop.f32.mrf.mxu0
      %v333 = vadd.f32 %v304, %v332
      %334 = vdwg.mxu0
      %v335 = vadd.f32 %v324, %v56
      %v336 = vadd.f32 %v327, %v61
      %v337 = vadd.f32 %v330, %v66
      %v338 = vadd.f32 %v333, %v71
      %v339 = vtanh.pop %v335
      %v340 = vtanh.pop %v336
      %v341 = vtanh.pop %v337
      %v342 = vtanh.pop %v338
      %343 = vmatpush.msra.mxu0 0.0
      %344 = vmatpush.msra.mxu0 0.0
      %345 = vmatpush.msra.mxu0 0.0
      %346 = vmatpush.msra.mxu0 0.0
      %347 = vmatpush.msra.mxu0 0.0
      %348 = vmatpush.msra.mxu0 0.0
      %349 = vmatpush.msra.mxu0 0.0
      %350 = vmatpush.msra.mxu0 0.0
      %351 = vmatpush.msra.mxu0 0.0
      %352 = vmatpush.msra.mxu0 0.0
      %353 = vmatpush.msra.mxu0 0.0
      %354 = vmatpush.msra.mxu0 0.0
      %355 = vmatpush.msra.mxu0 %v342
      %356 = vmatpush.msra.mxu0 %v341
      %357 = vmatpush.msra.mxu0 %v340
      %358 = vmatpush.msra.mxu0 %v339
      %359 = vmatmul.f32.gmra.mxu0 %v206
      %v360 = vpop.f32.mrf.mxu0
      %v361 = vadd.f32 %v80, %v360
      %362 = vmatmul.f32.gmra.mxu0 %v209
      %v363 = vpop.f32.mrf.mxu0
      %v364 = vadd.f32 %v85, %v363
      %365 = vmatmul.f32.gmra.mxu0 %v212
      %v366 = vpop.f32.mrf.mxu0
      %v367 = vadd.f32 %v90, %v366
      %368 = vmatmul.f32.gmra.mxu0 %v215
      %v369 = vpop.f32.mrf.mxu0
      %v370 = vadd.f32 %v95, %v369
      %371 = vdwg.mxu0
      %v372 = vtanh.pop %v361
      %v373 = vtanh.pop %v364
      %v374 = vtanh.pop %v367
      %v375 = vtanh.pop %v370
      %376 = vmatpush.msra.mxu0 0.0
      %377 = vmatpush.msra.mxu0 0.0
      %378 = vmatpush.msra.mxu0 0.0
      %379 = vmatpush.msra.mxu0 0.0
      %380 = vmatpush.msra.mxu0 0.0
      %381 = vmatpush.msra.mxu0 0.0
      %382 = vmatpush.msra.mxu0 0.0
      %383 = vmatpush.msra.mxu0 0.0
      %384 = vmatpush.msra.mxu0 0.0
      %385 = vmatpush.msra.mxu0 0.0
      %386 = vmatpush.msra.mxu0 0.0
      %387 = vmatpush.msra.mxu0 0.0
      %388 = vmatpush.msra.mxu0 %v375
      %389 = vmatpush.msra.mxu0 %v374
      %390 = vmatpush.msra.mxu0 %v373
      %391 = vmatpush.msra.mxu0 %v372
      %392 = vmatmul.f32.gmra.mxu0 %v251
      %v393 = vpop.f32.mrf.mxu0
      %v394 = vadd.f32 %v101, %v393
      %395 = vdwg.mxu0
      %v396 = vmul.f32 %v276, 0.0078125
      %v397 = vadd.f32 %v111, %v396
      %v398 = vmul.f32 %v394, 0.0078125
      %v399 = vadd.f32 %v112, %v398
      %400 = vmatpush.msra.mxu0 0.0
      %401 = vmatpush.msra.mxu0 0.0
      %402 = vmatpush.msra.mxu0 0.0
      %403 = vmatpush.msra.mxu0 0.0
      %404 = vmatpush.msra.mxu0 0.0
      %405 = vmatpush.msra.mxu0 0.0
      %406 = vmatpush.msra.mxu0 0.0
      %407 = vmatpush.msra.mxu0 0.0
      %408 = vmatpush.msra.mxu0 0.0
      %409 = vmatpush.msra.mxu0 0.0
      %410 = vmatpush.msra.mxu0 0.0
      %411 = vmatpush.msra.mxu0 0.0
      %412 = vmatpush.msra.mxu0 0.0
      %413 = vmatpush.msra.mxu0 0.0
      %414 = vmatpush.msra.mxu0 0.0
      %415 = vmatpush.msra.mxu0 %v399
      %416 = vmatmul.f32.gmra.mxu0 %v115
      %v417 = vpop.f32.mrf.mxu0
      %v418 = vadd.f32 0.0, %v417
      %419 = vmatmul.f32.gmra.mxu0 %v118
      %v420 = vpop.f32.mrf.mxu0
      %v421 = vadd.f32 0.0, %v420
      %422 = vmatmul.f32.gmra.mxu0 %v121
      %v423 = vpop.f32.mrf.mxu0
      %v424 = vadd.f32 0.0, %v423
      %425 = vmatmul.f32.gmra.mxu0 %v124
      %v426 = vpop.f32.mrf.mxu0
      %v427 = vadd.f32 0.0, %v426
      %428 = vdwg.mxu0
      %429 = vmatpush.msra.mxu0 0.0
      %430 = vmatpush.msra.mxu0 0.0
      %431 = vmatpush.msra.mxu0 0.0
      %432 = vmatpush.msra.mxu0 0.0
      %433 = vmatpush.msra.mxu0 0.0
      %434 = vmatpush.msra.mxu0 0.0
      %435 = vmatpush.msra.mxu0 0.0
      %436 = vmatpush.msra.mxu0 0.0
      %437 = vmatpush.msra.mxu0 0.0
      %438 = vmatpush.msra.mxu0 0.0
      %439 = vmatpush.msra.mxu0 0.0
      %440 = vmatpush.msra.mxu0 0.0
      %441 = vmatpush.msra.mxu0 0.0
      %442 = vmatpush.msra.mxu0 0.0
      %443 = vmatpush.msra.mxu0 0.0
      %444 = vmatpush.msra.mxu0 %v397
      %445 = vmatmul.f32.gmra.mxu0 %v156
      %v446 = vpop.f32.mrf.mxu0
      %v447 = vadd.f32 %v418, %v446
      %448 = vmatmul.f32.gmra.mxu0 %v159
      %v449 = vpop.f32.mrf.mxu0
      %v450 = vadd.f32 %v421, %v449
      %451 = vmatmul.f32.gmra.mxu0 %v162
      %v452 = vpop.f32.mrf.mxu0
      %v453 = vadd.f32 %v424, %v452
      %454 = vmatmul.f32.gmra.mxu0 %v165
      %v455 = vpop.f32.mrf.mxu0
      %v456 = vadd.f32 %v427, %v455
      %457 = vdwg.mxu0
      %v458 = vadd.f32 %v447, %v56
      %v459 = vadd.f32 %v450, %v61
      %v460 = vadd.f32 %v453, %v66
      %v461 = vadd.f32 %v456, %v71
      %v462 = vtanh.pop %v458
      %v463 = vtanh.pop %v459
      %v464 = vtanh.pop %v460
      %v465 = vtanh.pop %v461
      %466 = vmatpush.msra.mxu0 0.0
      %467 = vmatpush.msra.mxu0 0.0
      %468 = vmatpush.msra.mxu0 0.0
      %469 = vmatpush.msra.mxu0 0.0
      %470 = vmatpush.msra.mxu0 0.0
      %471 = vmatpush.msra.mxu0 0.0
      %472 = vmatpush.msra.mxu0 0.0
      %473 = vmatpush.msra.mxu0 0.0
      %474 = vmatpush.msra.mxu0 0.0
      %475 = vmatpush.msra.mxu0 0.0
      %476 = vmatpush.msra.mxu0 0.0
      %477 = vmatpush.msra.mxu0 0.0
      %478 = vmatpush.msra.mxu0 %v465
      %479 = vmatpush.msra.mxu0 %v464
      %480 = vmatpush.msra.mxu0 %v463
      %481 = vmatpush.msra.mxu0 %v462
      %482 = vmatmul.f32.gmra.mxu0 %v206
      %v483 = vpop.f32.mrf.mxu0
      %v484 = vadd.f32 %v80, %v483
      %485 = vmatmul.f32.gmra.mxu0 %v209
      %v486 = vpop.f32.mrf.mxu0
      %v487 = vadd.f32 %v85, %v486
      %488 = vmatmul.f32.gmra.mxu0 %v212
      %v489 = vpop.f32.mrf.mxu0
      %v490 = vadd.f32 %v90, %v489
      %491 = vmatmul.f32.gmra.mxu0 %v215
      %v492 = vpop.f32.mrf.mxu0
      %v493 = vadd.f32 %v95, %v492
      %494 = vdwg.mxu0
      %v495 = vtanh.pop %v484
      %v496 = vtanh.pop %v487
      %v497 = vtanh.pop %v490
      %v498 = vtanh.pop %v493
      %499 = vmatpush.msra.mxu0 0.0
      %500 = vmatpush.msra.mxu0 0.0
      %501 = vmatpush.msra.mxu0 0.0
      %502 = vmatpush.msra.mxu0 0.0
      %503 = vmatpush.msra.mxu0 0.0
      %504 = vmatpush.msra.mxu0 0.0
      %505 = vmatpush.msra.mxu0 0.0
      %506 = vmatpush.msra.mxu0 0.0
      %507 = vmatpush.msra.mxu0 0.0
      %508 = vmatpush.msra.mxu0 0.0
      %509 = vmatpush.msra.mxu0 0.0
      %510 = vmatpush.msra.mxu0 0.0
      %511 = vmatpush.msra.mxu0 %v498
      %512 = vmatpush.msra.mxu0 %v497
      %513 = vmatpush.msra.mxu0 %v496
      %514 = vmatpush.msra.mxu0 %v495
      %515 = vmatmul.f32.gmra.mxu0 %v251
      %v516 = vpop.f32.mrf.mxu0
      %v517 = vadd.f32 %v101, %v516
      %518 = vdwg.mxu0
      %v519 = vmul.f32 %v399, 0.015625
      %v520 = vadd.f32 %v111, %v519
      %v521 = vmul.f32 %v517, 0.015625
      %v522 = vadd.f32 %v112, %v521
      %523 = vmatpush.msra.mxu0 0.0
      %524 = vmatpush.msra.mxu0 0.0
      %525 = vmatpush.msra.mxu0 0.0
      %526 = vmatpush.msra.mxu0 0.0
      %527 = vmatpush.msra.mxu0 0.0
      %528 = vmatpush.msra.mxu0 0.0
      %529 = vmatpush.msra.mxu0 0.0
      %530 = vmatpush.msra.mxu0 0.0
      %531 = vmatpush.msra.mxu0 0.0
      %532 = vmatpush.msra.mxu0 0.0
      %533 = vmatpush.msra.mxu0 0.0
      %534 = vmatpush.msra.mxu0 0.0
      %535 = vmatpush.msra.mxu0 0.0
      %536 = vmatpush.msra.mxu0 0.0
      %537 = vmatpush.msra.mxu0 0.0
      %538 = vmatpush.msra.mxu0 %v522
      %539 = vmatmul.f32.gmra.mxu0 %v115
      %v540 = vpop.f32.mrf.mxu0
      %v541 = vadd.f32 0.0, %v540
      %542 = vmatmul.f32.gmra.mxu0 %v118
      %v543 = vpop.f32.mrf.mxu0
      %v544 = vadd.f32 0.0, %v543
      %545 = vmatmul.f32.gmra.mxu0 %v121
      %v546 = vpop.f32.mrf.mxu0
      %v547 = vadd.f32 0.0, %v546
      %548 = vmatmul.f32.gmra.mxu0 %v124
      %v549 = vpop.f32.mrf.mxu0
      %v550 = vadd.f32 0.0, %v549
      %551 = vdwg.mxu0
      %552 = vmatpush.msra.mxu0 0.0
      %553 = vmatpush.msra.mxu0 0.0
      %554 = vmatpush.msra.mxu0 0.0
      %555 = vmatpush.msra.mxu0 0.0
      %556 = vmatpush.msra.mxu0 0.0
      %557 = vmatpush.msra.mxu0 0.0
      %558 = vmatpush.msra.mxu0 0.0
      %559 = vmatpush.msra.mxu0 0.0
      %560 = vmatpush.msra.mxu0 0.0
      %561 = vmatpush.msra.mxu0 0.0
      %562 = vmatpush.msra.mxu0 0.0
      %563 = vmatpush.msra.mxu0 0.0
      %564 = vmatpush.msra.mxu0 0.0
      %565 = vmatpush.msra.mxu0 0.0
      %566 = vmatpush.msra.mxu0 0.0
      %567 = vmatpush.msra.mxu0 %v520
      %568 = vmatmul.f32.gmra.mxu0 %v156
      %v569 = vpop.f32.mrf.mxu0
      %v570 = vadd.f32 %v541, %v569
      %571 = vmatmul.f32.gmra.mxu0 %v159
      %v572 = vpop.f32.mrf.mxu0
      %v573 = vadd.f32 %v544, %v572
      %574 = vmatmul.f32.gmra.mxu0 %v162
      %v575 = vpop.f32.mrf.mxu0
      %v576 = vadd.f32 %v547, %v575
      %577 = vmatmul.f32.gmra.mxu0 %v165
      %v578 = vpop.f32.mrf.mxu0
      %v579 = vadd.f32 %v550, %v578
      %580 = vdwg.mxu0
      %v581 = vadd.f32 %v570, %v56
      %v582 = vadd.f32 %v573, %v61
      %v583 = vadd.f32 %v576, %v66
      %v584 = vadd.f32 %v579, %v71
      %v585 = vtanh.pop %v581
      %v586 = vtanh.pop %v582
      %v587 = vtanh.pop %v583
      %v588 = vtanh.pop %v584
      %589 = vmatpush.msra.mxu0 0.0
      %590 = vmatpush.msra.mxu0 0.0
      %591 = vmatpush.msra.mxu0 0.0
      %592 = vmatpush.msra.mxu0 0.0
      %593 = vmatpush.msra.mxu0 0.0
      %594 = vmatpush.msra.mxu0 0.0
      %595 = vmatpush.msra.mxu0 0.0
      %596 = vmatpush.msra.mxu0 0.0
      %597 = vmatpush.msra.mxu0 0.0
      %598 = vmatpush.msra.mxu0 0.0
      %599 = vmatpush.msra.mxu0 0.0
      %600 = vmatpush.msra.mxu0 0.0
      %601 = vmatpush.msra.mxu0 %v588
      %602 = vmatpush.msra.mxu0 %v587
      %603 = vmatpush.msra.mxu0 %v586
      %604 = vmatpush.msra.mxu0 %v585
      %605 = vmatmul.f32.gmra.mxu0 %v206
      %v606 = vpop.f32.mrf.mxu0
      %v607 = vadd.f32 %v80, %v606
      %608 = vmatmul.f32.gmra.mxu0 %v209
      %v609 = vpop.f32.mrf.mxu0
      %v610 = vadd.f32 %v85, %v609
      %611 = vmatmul.f32.gmra.mxu0 %v212
      %v612 = vpop.f32.mrf.mxu0
      %v613 = vadd.f32 %v90, %v612
      %614 = vmatmul.f32.gmra.mxu0 %v215
      %v615 = vpop.f32.mrf.mxu0
      %v616 = vadd.f32 %v95, %v615
      %617 = vdwg.mxu0
      %v618 = vtanh.pop %v607
      %v619 = vtanh.pop %v610
      %v620 = vtanh.pop %v613
      %v621 = vtanh.pop %v616
      %622 = vmatpush.msra.mxu0 0.0
      %623 = vmatpush.msra.mxu0 0.0
      %624 = vmatpush.msra.mxu0 0.0
      %625 = vmatpush.msra.mxu0 0.0
      %626 = vmatpush.msra.mxu0 0.0
      %627 = vmatpush.msra.mxu0 0.0
      %628 = vmatpush.msra.mxu0 0.0
      %629 = vmatpush.msra.mxu0 0.0
      %630 = vmatpush.msra.mxu0 0.0
      %631 = vmatpush.msra.mxu0 0.0
      %632 = vmatpush.msra.mxu0 0.0
      %633 = vmatpush.msra.mxu0 0.0
      %634 = vmatpush.msra.mxu0 %v621
      %635 = vmatpush.msra.mxu0 %v620
      %636 = vmatpush.msra.mxu0 %v619
      %637 = vmatpush.msra.mxu0 %v618
      %638 = vmatmul.f32.gmra.mxu0 %v251
      %v639 = vpop.f32.mrf.mxu0
      %v640 = vadd.f32 %v101, %v639
      %641 = vdwg.mxu0
      %v642 = vmul.f32 %v276, 2.0
      %v643 = vadd.f32 %v112, %v642
      %v644 = vmul.f32 %v399, 2.0
      %v645 = vadd.f32 %v643, %v644
      %v646 = vadd.f32 %v645, %v522
      %v647 = vmul.f32 %v646, 0.0026041667
      %v648 = vadd.f32 %v111, %v647
      %v649 = vmul.f32 %v394, 2.0
      %v650 = vadd.f32 %v271, %v649
      %v651 = vmul.f32 %v517, 2.0
      %v652 = vadd.f32 %v650, %v651
      %v653 = vadd.f32 %v652, %v640
      %v654 = vmul.f32 %v653, 0.0026041667
      %v655 = vadd.f32 %v112, %v654
      %656 = vmatpush.msra.mxu0 0.0
      %657 = vmatpush.msra.mxu0 0.0
      %658 = vmatpush.msra.mxu0 0.0
      %659 = vmatpush.msra.mxu0 0.0
      %660 = vmatpush.msra.mxu0 0.0
      %661 = vmatpush.msra.mxu0 0.0
      %662 = vmatpush.msra.mxu0 0.0
      %663 = vmatpush.msra.mxu0 0.0
      %664 = vmatpush.msra.mxu0 0.0
      %665 = vmatpush.msra.mxu0 0.0
      %666 = vmatpush.msra.mxu0 0.0
      %667 = vmatpush.msra.mxu0 0.0
      %668 = vmatpush.msra.mxu0 0.0
      %669 = vmatpush.msra.mxu0 0.0
      %670 = vmatpush.msra.mxu0 0.0
      %671 = vmatpush.msra.mxu0 %v655
      %672 = vmatmul.f32.gmra.mxu0 %v115
      %v673 = vpop.f32.mrf.mxu0
      %v674 = vadd.f32 0.0, %v673
      %675 = vmatmul.f32.gmra.mxu0 %v118
      %v676 = vpop.f32.mrf.mxu0
      %v677 = vadd.f32 0.0, %v676
      %678 = vmatmul.f32.gmra.mxu0 %v121
      %v679 = vpop.f32.mrf.mxu0
      %v680 = vadd.f32 0.0, %v679
      %681 = vmatmul.f32.gmra.mxu0 %v124
      %v682 = vpop.f32.mrf.mxu0
      %v683 = vadd.f32 0.0, %v682
      %684 = vdwg.mxu0
      %685 = vmatpush.msra.mxu0 0.0
      %686 = vmatpush.msra.mxu0 0.0
      %687 = vmatpush.msra.mxu0 0.0
      %688 = vmatpush.msra.mxu0 0.0
      %689 = vmatpush.msra.mxu0 0.0
      %690 = vmatpush.msra.mxu0 0.0
      %691 = vmatpush.msra.mxu0 0.0
      %692 = vmatpush.msra.mxu0 0.0
      %693 = vmatpush.msra.mxu0 0.0
      %694 = vmatpush.msra.mxu0 0.0
      %695 = vmatpush.msra.mxu0 0.0
      %696 = vmatpush.msra.mxu0 0.0
      %697 = vmatpush.msra.mxu0 0.0
      %698 = vmatpush.msra.mxu0 0.0
      %699 = vmatpush.msra.mxu0 0.0
      %700 = vmatpush.msra.mxu0 %v648
      %701 = vmatmul.f32.gmra.mxu0 %v156
      %v702 = vpop.f32.mrf.mxu0
      %v703 = vadd.f32 %v674, %v702
      %704 = vmatmul.f32.gmra.mxu0 %v159
      %v705 = vpop.f32.mrf.mxu0
      %v706 = vadd.f32 %v677, %v705
      %707 = vmatmul.f32.gmra.mxu0 %v162
      %v708 = vpop.f32.mrf.mxu0
      %v709 = vadd.f32 %v680, %v708
      %710 = vmatmul.f32.gmra.mxu0 %v165
      %v711 = vpop.f32.mrf.mxu0
      %v712 = vadd.f32 %v683, %v711
      %713 = vdwg.mxu0
      %v714 = vadd.f32 %v703, %v56
      %v715 = vadd.f32 %v706, %v61
      %v716 = vadd.f32 %v709, %v66
      %v717 = vadd.f32 %v712, %v71
      %v718 = vtanh.pop %v714
      %v719 = vtanh.pop %v715
      %v720 = vtanh.pop %v716
      %v721 = vtanh.pop %v717
      %722 = vmatpush.msra.mxu0 0.0
      %723 = vmatpush.msra.mxu0 0.0
      %724 = vmatpush.msra.mxu0 0.0
      %725 = vmatpush.msra.mxu0 0.0
      %726 = vmatpush.msra.mxu0 0.0
      %727 = vmatpush.msra.mxu0 0.0
      %728 = vmatpush.msra.mxu0 0.0
      %729 = vmatpush.msra.mxu0 0.0
      %730 = vmatpush.msra.mxu0 0.0
      %731 = vmatpush.msra.mxu0 0.0
      %732 = vmatpush.msra.mxu0 0.0
      %733 = vmatpush.msra.mxu0 0.0
      %734 = vmatpush.msra.mxu0 %v721
      %735 = vmatpush.msra.mxu0 %v720
      %736 = vmatpush.msra.mxu0 %v719
      %737 = vmatpush.msra.mxu0 %v718
      %738 = vmatmul.f32.gmra.mxu0 %v206
      %v739 = vpop.f32.mrf.mxu0
      %v740 = vadd.f32 %v80, %v739
      %741 = vmatmul.f32.gmra.mxu0 %v209
      %v742 = vpop.f32.mrf.mxu0
      %v743 = vadd.f32 %v85, %v742
      %744 = vmatmul.f32.gmra.mxu0 %v212
      %v745 = vpop.f32.mrf.mxu0
      %v746 = vadd.f32 %v90, %v745
      %747 = vmatmul.f32.gmra.mxu0 %v215
      %v748 = vpop.f32.mrf.mxu0
      %v749 = vadd.f32 %v95, %v748
      %750 = vdwg.mxu0
      %v751 = vtanh.pop %v740
      %v752 = vtanh.pop %v743
      %v753 = vtanh.pop %v746
      %v754 = vtanh.pop %v749
      %755 = vmatpush.msra.mxu0 0.0
      %756 = vmatpush.msra.mxu0 0.0
      %757 = vmatpush.msra.mxu0 0.0
      %758 = vmatpush.msra.mxu0 0.0
      %759 = vmatpush.msra.mxu0 0.0
      %760 = vmatpush.msra.mxu0 0.0
      %761 = vmatpush.msra.mxu0 0.0
      %762 = vmatpush.msra.mxu0 0.0
      %763 = vmatpush.msra.mxu0 0.0
      %764 = vmatpush.msra.mxu0 0.0
      %765 = vmatpush.msra.mxu0 0.0
      %766 = vmatpush.msra.mxu0 0.0
      %767 = vmatpush.msra.mxu0 %v754
      %768 = vmatpush.msra.mxu0 %v753
      %769 = vmatpush.msra.mxu0 %v752
      %770 = vmatpush.msra.mxu0 %v751
      %771 = vmatmul.f32.gmra.mxu0 %v251
      %v772 = vpop.f32.mrf.mxu0
      %v773 = vadd.f32 %v101, %v772
      %774 = vdwg.mxu0
      %v775 = vmul.f32 %v655, 0.0078125
      %v776 = vadd.f32 %v648, %v775
      %v777 = vmul.f32 %v773, 0.0078125
      %v778 = vadd.f32 %v655, %v777
      %779 = vmatpush.msra.mxu0 0.0
      %780 = vmatpush.msra.mxu0 0.0
      %781 = vmatpush.msra.mxu0 0.0
      %782 = vmatpush.msra.mxu0 0.0
      %783 = vmatpush.msra.mxu0 0.0
      %784 = vmatpush.msra.mxu0 0.0
      %785 = vmatpush.msra.mxu0 0.0
      %786 = vmatpush.msra.mxu0 0.0
      %787 = vmatpush.msra.mxu0 0.0
      %788 = vmatpush.msra.mxu0 0.0
      %789 = vmatpush.msra.mxu0 0.0
      %790 = vmatpush.msra.mxu0 0.0
      %791 = vmatpush.msra.mxu0 0.0
      %792 = vmatpush.msra.mxu0 0.0
      %793 = vmatpush.msra.mxu0 0.0
      %794 = vmatpush.msra.mxu0 %v778
      %795 = vmatmul.f32.gmra.mxu0 %v115
      %v796 = vpop.f32.mrf.mxu0
      %v797 = vadd.f32 0.0, %v796
      %798 = vmatmul.f32.gmra.mxu0 %v118
      %v799 = vpop.f32.mrf.mxu0
      %v800 = vadd.f32 0.0, %v799
      %801 = vmatmul.f32.gmra.mxu0 %v121
      %v802 = vpop.f32.mrf.mxu0
      %v803 = vadd.f32 0.0, %v802
      %804 = vmatmul.f32.gmra.mxu0 %v124
      %v805 = vpop.f32.mrf.mxu0
      %v806 = vadd.f32 0.0, %v805
      %807 = vdwg.mxu0
      %808 = vmatpush.msra.mxu0 0.0
      %809 = vmatpush.msra.mxu0 0.0
      %810 = vmatpush.msra.mxu0 0.0
      %811 = vmatpush.msra.mxu0 0.0
      %812 = vmatpush.msra.mxu0 0.0
      %813 = vmatpush.msra.mxu0 0.0
      %814 = vmatpush.msra.mxu0 0.0
      %815 = vmatpush.msra.mxu0 0.0
      %816 = vmatpush.msra.mxu0 0.0
      %817 = vmatpush.msra.mxu0 0.0
      %818 = vmatpush.msra.mxu0 0.0
      %819 = vmatpush.msra.mxu0 0.0
      %820 = vmatpush.msra.mxu0 0.0
      %821 = vmatpush.msra.mxu0 0.0
      %822 = vmatpush.msra.mxu0 0.0
      %823 = vmatpush.msra.mxu0 %v776
      %824 = vmatmul.f32.gmra.mxu0 %v156
      %v825 = vpop.f32.mrf.mxu0
      %v826 = vadd.f32 %v797, %v825
      %827 = vmatmul.f32.gmra.mxu0 %v159
      %v828 = vpop.f32.mrf.mxu0
      %v829 = vadd.f32 %v800, %v828
      %830 = vmatmul.f32.gmra.mxu0 %v162
      %v831 = vpop.f32.mrf.mxu0
      %v832 = vadd.f32 %v803, %v831
      %833 = vmatmul.f32.gmra.mxu0 %v165
      %v834 = vpop.f32.mrf.mxu0
      %v835 = vadd.f32 %v806, %v834
      %836 = vdwg.mxu0
      %v837 = vadd.f32 %v826, %v56
      %v838 = vadd.f32 %v829, %v61
      %v839 = vadd.f32 %v832, %v66
      %v840 = vadd.f32 %v835, %v71
      %v841 = vtanh.pop %v837
      %v842 = vtanh.pop %v838
      %v843 = vtanh.pop %v839
      %v844 = vtanh.pop %v840
      %845 = vmatpush.msra.mxu0 0.0
      %846 = vmatpush.msra.mxu0 0.0
      %847 = vmatpush.msra.mxu0 0.0
      %848 = vmatpush.msra.mxu0 0.0
      %849 = vmatpush.msra.mxu0 0.0
      %850 = vmatpush.msra.mxu0 0.0
      %851 = vmatpush.msra.mxu0 0.0
      %852 = vmatpush.msra.mxu0 0.0
      %853 = vmatpush.msra.mxu0 0.0
      %854 = vmatpush.msra.mxu0 0.0
      %855 = vmatpush.msra.mxu0 0.0
      %856 = vmatpush.msra.mxu0 0.0
      %857 = vmatpush.msra.mxu0 %v844
      %858 = vmatpush.msra.mxu0 %v843
      %859 = vmatpush.msra.mxu0 %v842
      %860 = vmatpush.msra.mxu0 %v841
      %861 = vmatmul.f32.gmra.mxu0 %v206
      %v862 = vpop.f32.mrf.mxu0
      %v863 = vadd.f32 %v80, %v862
      %864 = vmatmul.f32.gmra.mxu0 %v209
      %v865 = vpop.f32.mrf.mxu0
      %v866 = vadd.f32 %v85, %v865
      %867 = vmatmul.f32.gmra.mxu0 %v212
      %v868 = vpop.f32.mrf.mxu0
      %v869 = vadd.f32 %v90, %v868
      %870 = vmatmul.f32.gmra.mxu0 %v215
      %v871 = vpop.f32.mrf.mxu0
      %v872 = vadd.f32 %v95, %v871
      %873 = vdwg.mxu0
      %v874 = vtanh.pop %v863
      %v875 = vtanh.pop %v866
      %v876 = vtanh.pop %v869
      %v877 = vtanh.pop %v872
      %878 = vmatpush.msra.mxu0 0.0
      %879 = vmatpush.msra.mxu0 0.0
      %880 = vmatpush.msra.mxu0 0.0
      %881 = vmatpush.msra.mxu0 0.0
      %882 = vmatpush.msra.mxu0 0.0
      %883 = vmatpush.msra.mxu0 0.0
      %884 = vmatpush.msra.mxu0 0.0
      %885 = vmatpush.msra.mxu0 0.0
      %886 = vmatpush.msra.mxu0 0.0
      %887 = vmatpush.msra.mxu0 0.0
      %888 = vmatpush.msra.mxu0 0.0
      %889 = vmatpush.msra.mxu0 0.0
      %890 = vmatpush.msra.mxu0 %v877
      %891 = vmatpush.msra.mxu0 %v876
      %892 = vmatpush.msra.mxu0 %v875
      %893 = vmatpush.msra.mxu0 %v874
      %894 = vmatmul.f32.gmra.mxu0 %v251
      %v895 = vpop.f32.mrf.mxu0
      %v896 = vadd.f32 %v101, %v895
      %897 = vdwg.mxu0
      %v898 = vmul.f32 %v778, 0.0078125
      %v899 = vadd.f32 %v648, %v898
      %v900 = vmul.f32 %v896, 0.0078125
      %v901 = vadd.f32 %v655, %v900
      %902 = vmatpush.msra.mxu0 0.0
      %903 = vmatpush.msra.mxu0 0.0
      %904 = vmatpush.msra.mxu0 0.0
      %905 = vmatpush.msra.mxu0 0.0
      %906 = vmatpush.msra.mxu0 0.0
      %907 = vmatpush.msra.mxu0 0.0
      %908 = vmatpush.msra.mxu0 0.0
      %909 = vmatpush.msra.mxu0 0.0
      %910 = vmatpush.msra.mxu0 0.0
      %911 = vmatpush.msra.mxu0 0.0
      %912 = vmatpush.msra.mxu0 0.0
      %913 = vmatpush.msra.mxu0 0.0
      %914 = vmatpush.msra.mxu0 0.0
      %915 = vmatpush.msra.mxu0 0.0
      %916 = vmatpush.msra.mxu0 0.0
      %917 = vmatpush.msra.mxu0 %v901
      %918 = vmatmul.f32.gmra.mxu0 %v115
      %v919 = vpop.f32.mrf.mxu0
      %v920 = vadd.f32 0.0, %v919
      %921 = vmatmul.f32.gmra.mxu0 %v118
      %v922 = vpop.f32.mrf.mxu0
      %v923 = vadd.f32 0.0, %v922
      %924 = vmatmul.f32.gmra.mxu0 %v121
      %v925 = vpop.f32.mrf.mxu0
      %v926 = vadd.f32 0.0, %v925
      %927 = vmatmul.f32.gmra.mxu0 %v124
      %v928 = vpop.f32.mrf.mxu0
      %v929 = vadd.f32 0.0, %v928
      %930 = vdwg.mxu0
      %931 = vmatpush.msra.mxu0 0.0
      %932 = vmatpush.msra.mxu0 0.0
      %933 = vmatpush.msra.mxu0 0.0
      %934 = vmatpush.msra.mxu0 0.0
      %935 = vmatpush.msra.mxu0 0.0
      %936 = vmatpush.msra.mxu0 0.0
      %937 = vmatpush.msra.mxu0 0.0
      %938 = vmatpush.msra.mxu0 0.0
      %939 = vmatpush.msra.mxu0 0.0
      %940 = vmatpush.msra.mxu0 0.0
      %941 = vmatpush.msra.mxu0 0.0
      %942 = vmatpush.msra.mxu0 0.0
      %943 = vmatpush.msra.mxu0 0.0
      %944 = vmatpush.msra.mxu0 0.0
      %945 = vmatpush.msra.mxu0 0.0
      %946 = vmatpush.msra.mxu0 %v899
      %947 = vmatmul.f32.gmra.mxu0 %v156
      %v948 = vpop.f32.mrf.mxu0
      %v949 = vadd.f32 %v920, %v948
      %950 = vmatmul.f32.gmra.mxu0 %v159
      %v951 = vpop.f32.mrf.mxu0
      %v952 = vadd.f32 %v923, %v951
      %953 = vmatmul.f32.gmra.mxu0 %v162
      %v954 = vpop.f32.mrf.mxu0
      %v955 = vadd.f32 %v926, %v954
      %956 = vmatmul.f32.gmra.mxu0 %v165
      %v957 = vpop.f32.mrf.mxu0
      %v958 = vadd.f32 %v929, %v957
      %959 = vdwg.mxu0
      %v960 = vadd.f32 %v949, %v56
      %v961 = vadd.f32 %v952, %v61
      %v962 = vadd.f32 %v955, %v66
      %v963 = vadd.f32 %v958, %v71
      %v964 = vtanh.pop %v960
      %v965 = vtanh.pop %v961
      %v966 = vtanh.pop %v962
      %v967 = vtanh.pop %v963
      %968 = vmatpush.msra.mxu0 0.0
      %969 = vmatpush.msra.mxu0 0.0
      %970 = vmatpush.msra.mxu0 0.0
      %971 = vmatpush.msra.mxu0 0.0
      %972 = vmatpush.msra.mxu0 0.0
      %973 = vmatpush.msra.mxu0 0.0
      %974 = vmatpush.msra.mxu0 0.0
      %975 = vmatpush.msra.mxu0 0.0
      %976 = vmatpush.msra.mxu0 0.0
      %977 = vmatpush.msra.mxu0 0.0
      %978 = vmatpush.msra.mxu0 0.0
      %979 = vmatpush.msra.mxu0 0.0
      %980 = vmatpush.msra.mxu0 %v967
      %981 = vmatpush.msra.mxu0 %v966
      %982 = vmatpush.msra.mxu0 %v965
      %983 = vmatpush.msra.mxu0 %v964
      %984 = vmatmul.f32.gmra.mxu0 %v206
      %v985 = vpop.f32.mrf.mxu0
      %v986 = vadd.f32 %v80, %v985
      %987 = vmatmul.f32.gmra.mxu0 %v209
      %v988 = vpop.f32.mrf.mxu0
      %v989 = vadd.f32 %v85, %v988
      %990 = vmatmul.f32.gmra.mxu0 %v212
      %v991 = vpop.f32.mrf.mxu0
      %v992 = vadd.f32 %v90, %v991
      %993 = vmatmul.f32.gmra.mxu0 %v215
      %v994 = vpop.f32.mrf.mxu0
      %v995 = vadd.f32 %v95, %v994
      %996 = vdwg.mxu0
      %v997 = vtanh.pop %v986
      %v998 = vtanh.pop %v989
      %v999 = vtanh.pop %v992
      %v1000 = vtanh.pop %v995
      %1001 = vmatpush.msra.mxu0 0.0
      %1002 = vmatpush.msra.mxu0 0.0
      %1003 = vmatpush.msra.mxu0 0.0
      %1004 = vmatpush.msra.mxu0 0.0
      %1005 = vmatpush.msra.mxu0 0.0
      %1006 = vmatpush.msra.mxu0 0.0
      %1007 = vmatpush.msra.mxu0 0.0
      %1008 = vmatpush.msra.mxu0 0.0
      %1009 = vmatpush.msra.mxu0 0.0
      %1010 = vmatpush.msra.mxu0 0.0
      %1011 = vmatpush.msra.mxu0 0.0
      %1012 = vmatpush.msra.mxu0 0.0
      %1013 = vmatpush.msra.mxu0 %v1000
      %1014 = vmatpush.msra.mxu0 %v999
      %1015 = vmatpush.msra.mxu0 %v998
      %1016 = vmatpush.msra.mxu0 %v997
      %1017 = vmatmul.f32.gmra.mxu0 %v251
      %v1018 = vpop.f32.mrf.mxu0
      %v1019 = vadd.f32 %v101, %v1018
      %1020 = vdwg.mxu0
      %v1021 = vmul.f32 %v901, 0.015625
      %v1022 = vadd.f32 %v648, %v1021
      %v1023 = vmul.f32 %v1019, 0.015625
      %v1024 = vadd.f32 %v655, %v1023
      %1025 = vmatpush.msra.mxu0 0.0
      %1026 = vmatpush.msra.mxu0 0.0
      %1027 = vmatpush.msra.mxu0 0.0
      %1028 = vmatpush.msra.mxu0 0.0
      %1029 = vmatpush.msra.mxu0 0.0
      %1030 = vmatpush.msra.mxu0 0.0
      %1031 = vmatpush.msra.mxu0 0.0
      %1032 = vmatpush.msra.mxu0 0.0
      %1033 = vmatpush.msra.mxu0 0.0
      %1034 = vmatpush.msra.mxu0 0.0
      %1035 = vmatpush.msra.mxu0 0.0
      %1036 = vmatpush.msra.mxu0 0.0
      %1037 = vmatpush.msra.mxu0 0.0
      %1038 = vmatpush.msra.mxu0 0.0
      %1039 = vmatpush.msra.mxu0 0.0
      %1040 = vmatpush.msra.mxu0 %v1024
      %1041 = vmatmul.f32.gmra.mxu0 %v115
      %v1042 = vpop.f32.mrf.mxu0
      %v1043 = vadd.f32 0.0, %v1042
      %1044 = vmatmul.f32.gmra.mxu0 %v118
      %v1045 = vpop.f32.mrf.mxu0
      %v1046 = vadd.f32 0.0, %v1045
      %1047 = vmatmul.f32.gmra.mxu0 %v121
      %v1048 = vpop.f32.mrf.mxu0
      %v1049 = vadd.f32 0.0, %v1048
      %1050 = vmatmul.f32.gmra.mxu0 %v124
      %v1051 = vpop.f32.mrf.mxu0
      %v1052 = vadd.f32 0.0, %v1051
      %1053 = vdwg.mxu0
      %1054 = vmatpush.msra.mxu0 0.0
      %1055 = vmatpush.msra.mxu0 0.0
      %1056 = vmatpush.msra.mxu0 0.0
      %1057 = vmatpush.msra.mxu0 0.0
      %1058 = vmatpush.msra.mxu0 0.0
      %1059 = vmatpush.msra.mxu0 0.0
      %1060 = vmatpush.msra.mxu0 0.0
      %1061 = vmatpush.msra.mxu0 0.0
      %1062 = vmatpush.msra.mxu0 0.0
      %1063 = vmatpush.msra.mxu0 0.0
      %1064 = vmatpush.msra.mxu0 0.0
      %1065 = vmatpush.msra.mxu0 0.0
      %1066 = vmatpush.msra.mxu0 0.0
      %1067 = vmatpush.msra.mxu0 0.0
      %1068 = vmatpush.msra.mxu0 0.0
      %1069 = vmatpush.msra.mxu0 %v1022
      %1070 = vmatmul.f32.gmra.mxu0 %v156
      %v1071 = vpop.f32.mrf.mxu0
      %v1072 = vadd.f32 %v1043, %v1071
      %1073 = vmatmul.f32.gmra.mxu0 %v159
      %v1074 = vpop.f32.mrf.mxu0
      %v1075 = vadd.f32 %v1046, %v1074
      %1076 = vmatmul.f32.gmra.mxu0 %v162
      %v1077 = vpop.f32.mrf.mxu0
      %v1078 = vadd.f32 %v1049, %v1077
      %1079 = vmatmul.f32.gmra.mxu0 %v165
      %v1080 = vpop.f32.mrf.mxu0
      %v1081 = vadd.f32 %v1052, %v1080
      %1082 = vdwg.mxu0
      %v1083 = vadd.f32 %v1072, %v56
      %v1084 = vadd.f32 %v1075, %v61
      %v1085 = vadd.f32 %v1078, %v66
      %v1086 = vadd.f32 %v1081, %v71
      %v1087 = vtanh.pop %v1083
      %v1088 = vtanh.pop %v1084
      %v1089 = vtanh.pop %v1085
      %v1090 = vtanh.pop %v1086
      %1091 = vmatpush.msra.mxu0 0.0
      %1092 = vmatpush.msra.mxu0 0.0
      %1093 = vmatpush.msra.mxu0 0.0
      %1094 = vmatpush.msra.mxu0 0.0
      %1095 = vmatpush.msra.mxu0 0.0
      %1096 = vmatpush.msra.mxu0 0.0
      %1097 = vmatpush.msra.mxu0 0.0
      %1098 = vmatpush.msra.mxu0 0.0
      %1099 = vmatpush.msra.mxu0 0.0
      %1100 = vmatpush.msra.mxu0 0.0
      %1101 = vmatpush.msra.mxu0 0.0
      %1102 = vmatpush.msra.mxu0 0.0
      %1103 = vmatpush.msra.mxu0 %v1090
      %1104 = vmatpush.msra.mxu0 %v1089
      %1105 = vmatpush.msra.mxu0 %v1088
      %1106 = vmatpush.msra.mxu0 %v1087
      %1107 = vmatmul.f32.gmra.mxu0 %v206
      %v1108 = vpop.f32.mrf.mxu0
      %v1109 = vadd.f32 %v80, %v1108
      %1110 = vmatmul.f32.gmra.mxu0 %v209
      %v1111 = vpop.f32.mrf.mxu0
      %v1112 = vadd.f32 %v85, %v1111
      %1113 = vmatmul.f32.gmra.mxu0 %v212
      %v1114 = vpop.f32.mrf.mxu0
      %v1115 = vadd.f32 %v90, %v1114
      %1116 = vmatmul.f32.gmra.mxu0 %v215
      %v1117 = vpop.f32.mrf.mxu0
      %v1118 = vadd.f32 %v95, %v1117
      %1119 = vdwg.mxu0
      %v1120 = vtanh.pop %v1109
      %v1121 = vtanh.pop %v1112
      %v1122 = vtanh.pop %v1115
      %v1123 = vtanh.pop %v1118
      %1124 = vmatpush.msra.mxu0 0.0
      %1125 = vmatpush.msra.mxu0 0.0
      %1126 = vmatpush.msra.mxu0 0.0
      %1127 = vmatpush.msra.mxu0 0.0
      %1128 = vmatpush.msra.mxu0 0.0
      %1129 = vmatpush.msra.mxu0 0.0
      %1130 = vmatpush.msra.mxu0 0.0
      %1131 = vmatpush.msra.mxu0 0.0
      %1132 = vmatpush.msra.mxu0 0.0
      %1133 = vmatpush.msra.mxu0 0.0
      %1134 = vmatpush.msra.mxu0 0.0
      %1135 = vmatpush.msra.mxu0 0.0
      %1136 = vmatpush.msra.mxu0 %v1123
      %1137 = vmatpush.msra.mxu0 %v1122
      %1138 = vmatpush.msra.mxu0 %v1121
      %1139 = vmatpush.msra.mxu0 %v1120
      %1140 = vmatmul.f32.gmra.mxu0 %v251
      %v1141 = vpop.f32.mrf.mxu0
      %v1142 = vadd.f32 %v101, %v1141
      %1143 = vdwg.mxu0
      %v1144 = vmul.f32 %v778, 2.0
      %v1145 = vadd.f32 %v655, %v1144
      %v1146 = vmul.f32 %v901, 2.0
      %v1147 = vadd.f32 %v1145, %v1146
      %v1148 = vadd.f32 %v1147, %v1024
      %v1149 = vmul.f32 %v1148, 0.0026041667
      %v1150 = vadd.f32 %v648, %v1149
      %v1151 = vmul.f32 %v896, 2.0
      %v1152 = vadd.f32 %v773, %v1151
      %v1153 = vmul.f32 %v1019, 2.0
      %v1154 = vadd.f32 %v1152, %v1153
      %v1155 = vadd.f32 %v1154, %v1142
      %v1156 = vmul.f32 %v1155, 0.0026041667
      %v1157 = vadd.f32 %v655, %v1156
    $region42: #{tpu_custom_call.1} parent=1 // loop_footer
      %s110 = sadd.s32 1, %s106
    $region43: #{tpu_custom_call.1} parent=1 // loop_footer_branch
      %105 = sbr.rel target = $region39
    $region44: #{tpu_custom_call.1} parent=1 // loop_exit
      _
    %1158 = vst [vmem:[#allocation2] sm:$0xff] %v111
    %1159 = vst [vmem:[#allocation4] sm:$0xff] %v112
    // Predicated region
    $region45: #{tpu_custom_call.1} parent=1 // pred_check
      _
    $region46: #{tpu_custom_call.1} parent=1 // pred_check_branch
      %1161 = sbr.rel (0) target = $region48
    $region47: #{tpu_custom_call.1} parent=1 // pred_region
      %1163 = vsyncadd [#allocation3], 0
      %s1165 = sshll.u32 [#allocation2], 4
      %s1166 = int_to_ptr.vmem [resolvable:$true] %s1165
      %s1167 = sshll.u32 %s9, 4
      %s1168 = int_to_ptr.hbm [resolvable:$true] %s1167
      %1170 = dma.vmem_to_hbm [thread:$0]  %s1166, 128, %s1168, [#allocation3]
    $region48: #{tpu_custom_call.1} parent=1 // pred_fallthru
      _
    // Predicated region
    $region49: #{tpu_custom_call.1} parent=1 // pred_check
      _
    $region50: #{tpu_custom_call.1} parent=1 // pred_check_branch
      %1172 = sbr.rel (0) target = $region52
    $region51: #{tpu_custom_call.1} parent=1 // pred_region
      %1174 = vsyncadd [#allocation5], 0
      %s1176 = sshll.u32 [#allocation4], 4
      %s1177 = int_to_ptr.vmem [resolvable:$true] %s1176
      %s1178 = sshll.u32 %s10, 4
      %s1179 = int_to_ptr.hbm [resolvable:$true] %s1178
      %1181 = dma.vmem_to_hbm [thread:$0]  %s1177, 128, %s1179, [#allocation5]
    $region52: #{tpu_custom_call.1} parent=1 // pred_fallthru
      _
    // Predicated region
    $region53: #{tpu_custom_call.1} parent=1 // pred_check
      _
    $region54: #{tpu_custom_call.1} parent=1 // pred_check_branch
      %1183 = sbr.rel (0) target = $region56
    $region55: #{tpu_custom_call.1} parent=1 // pred_region
      %1185 = dma.done [#allocation3], 128
    $region56: #{tpu_custom_call.1} parent=1 // pred_fallthru
      _
    // Predicated region
    $region57: #{tpu_custom_call.1} parent=1 // pred_check
      _
    $region58: #{tpu_custom_call.1} parent=1 // pred_check_branch
      %1187 = sbr.rel (0) target = $region60
    $region59: #{tpu_custom_call.1} parent=1 // pred_region
      %1189 = dma.done [#allocation5], 128
    $region60: #{tpu_custom_call.1} parent=1 // pred_fallthru
      _
    %1190 = vsyncpa [#allocation3], 1
    %1191 = vsyncpa [#allocation5], 1

</llo_original>
